<compile_context>
chip_gen: v7x
topology: tpu7x:2x2x1
jax: 0.10.0
libtpu: 0.0.40
codegen_flags: <defaults>
</compile_context>

<pallas_src>
import numpy as np
import jax
import jax.numpy as jnp
from jax.experimental import pallas as pl
from jax.experimental.pallas import tpu as pltpu

# ----- problem sizes (small, consistent with the module) -----
EXAMPLES_LEN = 5
CONTEXT_LEN = 3
EC = EXAMPLES_LEN + CONTEXT_LEN      # 8 data panels
K = 4                                # number of VSA blocks
D = 128                              # per-block dimension (lane axis)
N_PANELS = EC + 1                    # data panels + identity = 9
NT = 12                              # learnable terms
NHALF = NT // 2                      # terms per numerator / denominator half

B_TILE = 2                           # batch items per grid step (keeps every block (8,128)-aligned)
TBK = B_TILE * K                     # 8 (b, k) groups per step
COLS = B_TILE * EC * K               # 64 data-panel rows per step
HALF_ROWS = NHALF * TBK              # 48 (term, group) rows per half

_HI = jax.lax.Precision.HIGHEST      # only on the tiny 0/1-selector matmul


def _build_constants():
    """Shape-only constants, built with numpy at trace time (baked into the executable)."""
    n = np.arange(D)
    ang = (2.0 * np.pi / D) * ((n[:, None] * n[None, :]) % D).astype(np.float64)
    f_re = np.cos(ang)
    f_im = -np.sin(ang)
    f_fwd = np.concatenate([f_re, f_im], axis=1).astype(np.float32)        # (D, 2D)  [Re | Im]
    f_inv = (np.concatenate([f_re, f_im], axis=0) / D).astype(np.float32)  # (2D, D)  1/D folded in

    # per-step column bookkeeping: data rows ordered (b_local, panel, k)
    bb, pp, kk = np.meshgrid(np.arange(B_TILE), np.arange(EC), np.arange(K), indexing="ij")
    col_panel = pp.reshape(-1)                                             # (COLS,)
    col_group = (bb * K + kk).reshape(-1)                                  # (COLS,)
    psel = np.eye(EC, dtype=np.float32)[col_panel].T                       # (EC, COLS)  panel selector
    gmask = (np.arange(TBK)[:, None] == col_group[None, :]).astype(np.float32)  # (TBK, COLS)
    sel = np.concatenate([psel, gmask], axis=0)                            # (16, 64) packed constant
    return f_fwd, f_inv, sel


_F_FWD_NP, _F_INV_NP, _SEL_NP = _build_constants()


def _formula_kernel(p_ref, w_ref, sel_ref, ffwd_ref, finv_ref, o_ref):
    # p:(64,128) data-panel rows (b,p,k)-major   w:(12,9) raw term weights
    # sel:(16,64) [psel | gmask]   ffwd:(128,256) bf16   finv:(256,128) bf16
    # o:(8,128) = block_unbinding2(numerator, denominator), rows ordered (b,k)
    f32, bf16 = jnp.float32, jnp.bfloat16

    # softmax over the 9 panels for all 12 terms (exact f32; one vreg of VPU/EUP work)
    wl = w_ref[...]
    wl = wl - jnp.max(wl, axis=-1, keepdims=True)
    e = jnp.exp(wl)
    w_sm = e / jnp.sum(e, axis=-1, keepdims=True)                 # (NT, N_PANELS)
    w_data = w_sm[:, :EC]                                         # (NT, EC)  data-panel weights
    w_id = w_sm[:, EC:N_PANELS]                                   # (NT, 1)   identity-panel weight

    psel = sel_ref[0:EC, :]                                       # (EC, COLS)  0/1 panel selector
    gmask = sel_ref[EC:EC + TBK, :]                               # (TBK, COLS) 0/1 (b,k)-group mask

    # forward DFT of every data-panel row, once (bf16 operands, f32 accumulate, one MXU pass)
    pf = jnp.dot(p_ref[...].astype(bf16), ffwd_ref[...],
                 preferred_element_type=f32)                      # (COLS, 2D)
    pf_bf = pf.astype(bf16)

    # softmax weight of the panel feeding each data column.  Tiny 0/1-selector matmul; HIGHEST
    # keeps the numerically sensitive weights exact (~40 KFLOP total, negligible).
    ws_cols = jnp.dot(w_data, psel, preferred_element_type=f32, precision=_HI)   # (NT, COLS)

    # per-(term, group) mixing rows: exact sublane broadcast + group mask (no replication matmul)
    mix3 = ws_cols[:, None, :] * gmask[None, :, :]                # (NT, TBK, COLS)
    wid3 = jnp.broadcast_to(w_id[:, None, :], (NT, TBK, 1))       # (NT, TBK, 1)

    def cmul(a, b):
        ar, ai = a
        br, bi = b
        return ar * br - ai * bi, ar * bi + ai * br

    def fold_half(h):
        # Frequency-domain mixing of the 6 terms of one half (numerator or denominator).
        # The mix operand is split into a bf16 head + bf16 residual so the softmax weights stay
        # effectively f32-exact through two native single-pass bf16 matmuls (replaces the old
        # 6-pass HIGHEST contraction -> 3x less MXU work here).
        mh = mix3[h * NHALF:(h + 1) * NHALF].reshape(HALF_ROWS, COLS)         # (48, COLS)
        mh_hi = mh.astype(bf16)
        mh_lo = (mh - mh_hi.astype(f32)).astype(bf16)
        tf = (jnp.dot(mh_hi, pf_bf, preferred_element_type=f32) +
              jnp.dot(mh_lo, pf_bf, preferred_element_type=f32))              # (48, 2D)
        # identity panel: DFT(delta at 0) == 1 + 0j  ->  just add its weight to the real half
        wid = wid3[h * NHALF:(h + 1) * NHALF].reshape(HALF_ROWS, 1)           # (48, 1)
        t_re = tf[:, :D] + wid
        t_im = tf[:, D:]

        def term(i):
            s = i * TBK
            return t_re[s:s + TBK], t_im[s:s + TBK]

        # balanced pairwise tree over the 6 terms (block binding == product of block spectra)
        p01 = cmul(term(0), term(1))
        p23 = cmul(term(2), term(3))
        p45 = cmul(term(4), term(5))
        return cmul(cmul(p01, p23), p45)

    n_re, n_im = fold_half(0)        # numerator
    d_re, d_im = fold_half(1)        # denominator

    # block_unbinding2: circular correlation == multiply by the complex conjugate
    o_re = n_re * d_re + n_im * d_im
    o_im = n_im * d_re - n_re * d_im

    # inverse DFT (real part); 1/D folded into finv; single fused matmul
    spec = jnp.concatenate([o_re, o_im], axis=1).astype(bf16)                 # (TBK, 2D)
    o_ref[...] = jnp.dot(spec, finv_ref[...], preferred_element_type=f32)     # (TBK, D)


@jax.jit
def iraven_formula(x, ctx, weights):
    bsz = x.shape[0]
    assert bsz % B_TILE == 0, "batch must be a multiple of B_TILE"

    # Panel assembly exactly like the module: cat([x, ctx], dim=1).reshape(B, EC, k, d);
    # flattened to rows ordered (b, panel, k) -- contiguous, no transposes.
    panels = jnp.concatenate(
        [x.reshape(bsz, EXAMPLES_LEN, K, D), ctx.reshape(bsz, CONTEXT_LEN, K, D)],
        axis=1).reshape(bsz * EC * K, D).astype(jnp.float32)

    out = pl.pallas_call(
        _formula_kernel,
        out_shape=jax.ShapeDtypeStruct((bsz * K, D), jnp.float32),
        grid=(bsz // B_TILE,),
        in_specs=[
            pl.BlockSpec((COLS, D), lambda i: (i, 0)),             # per-step batch slab
            pl.BlockSpec((NT, N_PANELS), lambda i: (0, 0)),        # constants below stay
            pl.BlockSpec((EC + TBK, COLS), lambda i: (0, 0)),      # VMEM-resident across
            pl.BlockSpec((D, 2 * D), lambda i: (0, 0)),            # all grid steps
            pl.BlockSpec((2 * D, D), lambda i: (0, 0)),
        ],
        out_specs=pl.BlockSpec((TBK, D), lambda i: (i, 0)),
        compiler_params=pltpu.CompilerParams(
            dimension_semantics=("parallel",)),                    # shards batch over v7x's 2 TCs
    )(panels,
      weights.astype(jnp.float32),
      jnp.asarray(_SEL_NP),
      jnp.asarray(_F_FWD_NP, dtype=jnp.bfloat16),
      jnp.asarray(_F_INV_NP, dtype=jnp.bfloat16))

    return out.reshape(bsz, K * D)                                 # == output.view(B, -1)


def reference(x, ctx, weights):
    """Pure-JAX mirror of the PyTorch forward (bindings via jnp.fft)."""
    bsz = x.shape[0]
    xc = jnp.concatenate([x, ctx], axis=1).reshape(bsz, EC, K, D)
    ident = jnp.zeros((bsz, 1, K, D), x.dtype).at[:, :, :, 0].set(1.0)
    xc = jnp.concatenate([xc, ident], axis=1).reshape(bsz, N_PANELS, K * D)

    def wcomb(wt):
        a = jax.nn.softmax(wt)
        return jnp.einsum("p,bpf->bf", a, xc).reshape(bsz, K, D)

    def bind(a, b):
        return jnp.fft.ifft(jnp.fft.fft(a) * jnp.fft.fft(b)).real

    def unbind(a, b):
        return jnp.fft.ifft(jnp.fft.fft(a) * jnp.conj(jnp.fft.fft(b))).real

    terms = [wcomb(weights[t]) for t in range(NT)]
    nn_ = terms[0]
    for t_ in terms[1:NT // 2]:
        nn_ = bind(nn_, t_)
    dd = terms[NT // 2]
    for t_ in terms[NT // 2 + 1:]:
        dd = bind(dd, t_)
    return unbind(nn_, dd).reshape(bsz, -1)


if __name__ == "__main__":
    key = jax.random.PRNGKey(0)
    kx, kc, kw = jax.random.split(key, 3)
    B = 4                                            # small batch; grid = (B // B_TILE,) = (2,)
    # Example inputs: per-block PMFs (as in ARLC attribute distributions)
    x = jax.nn.softmax(jax.random.normal(kx, (B, EXAMPLES_LEN, K, D)),
                       axis=-1).reshape(B, EXAMPLES_LEN, K * D)
    ctx = jax.nn.softmax(jax.random.normal(kc, (B, CONTEXT_LEN, K, D)),
                         axis=-1).reshape(B, CONTEXT_LEN, K * D)
    # 12 learnable term vectors, init like nn.Parameter(t.randn(num_panels))
    weights = jax.random.normal(kw, (NT, N_PANELS), dtype=jnp.float32)

    out = jax.block_until_ready(iraven_formula(x, ctx, weights))
    assert out.shape == (B, K * D)

    ref = reference(x, ctx, weights)
    rel_err = jnp.max(jnp.abs(out - ref)) / (jnp.max(jnp.abs(ref)) + 1e-12)
    assert bool(rel_err < 2e-2), f"relative error too high: {rel_err}"
    print("KERNEL_OK")
</pallas_src>

<mosaic_0001>
module attributes {stable_mosaic.version = 11 : i64} {
  func.func @_formula_kernel(%arg0: i32, %arg1: memref<64x128xf32, #tpu.memory_space<vmem>>, %arg2: memref<12x9xf32, #tpu.memory_space<vmem>>, %arg3: memref<16x64xf32, #tpu.memory_space<vmem>>, %arg4: memref<128x256xbf16, #tpu.memory_space<vmem>>, %arg5: memref<256x128xbf16, #tpu.memory_space<vmem>>, %arg6: memref<8x128xf32, #tpu.memory_space<vmem>>) attributes {dimension_semantics = [#tpu.dimension_semantics<parallel>], iteration_bounds = array<i64: 2>, scalar_prefetch = 0 : i64, scratch_operands = 0 : i64, tpu.core_type = #tpu.core_type<tc>, window_params = [{transform_indices = @transform_0, window_bounds = array<i64: 64, 128>}, {pipeline_mode = #tpu.pipeline_mode<synchronous>, transform_indices = @transform_1, window_bounds = array<i64: 12, 9>}, {pipeline_mode = #tpu.pipeline_mode<synchronous>, transform_indices = @transform_2, window_bounds = array<i64: 16, 64>}, {pipeline_mode = #tpu.pipeline_mode<synchronous>, transform_indices = @transform_3, window_bounds = array<i64: 128, 256>}, {pipeline_mode = #tpu.pipeline_mode<synchronous>, transform_indices = @transform_4, window_bounds = array<i64: 256, 128>}, {transform_indices = @transform_5, window_bounds = array<i64: 8, 128>}]} {
    %c0 = arith.constant 0 : index
    %c0_0 = arith.constant 0 : index
    %0 = vector.load %arg2[%c0, %c0_0] : memref<12x9xf32, #tpu.memory_space<vmem>>, vector<12x9xf32>
    %cst = arith.constant dense<0xFF800000> : vector<12xf32>
    %1 = vector.multi_reduction <maximumf>, %0, %cst [1] : vector<12x9xf32> to vector<12xf32>
    %2 = vector.shape_cast %1 : vector<12xf32> to vector<12x1xf32>
    %3 = vector.broadcast %2 : vector<12x1xf32> to vector<12x9xf32>
    %4 = arith.subf %0, %3 : vector<12x9xf32>
    %5 = math.exp %4 : vector<12x9xf32>
    %cst_1 = arith.constant dense<0.000000e+00> : vector<12xf32>
    %6 = vector.multi_reduction <add>, %5, %cst_1 [1] : vector<12x9xf32> to vector<12xf32>
    %7 = vector.shape_cast %6 : vector<12xf32> to vector<12x1xf32>
    %8 = vector.broadcast %7 : vector<12x1xf32> to vector<12x9xf32>
    %9 = arith.divf %5, %8 : vector<12x9xf32>
    %10 = vector.extract_strided_slice %9 {offsets = [0, 0], sizes = [12, 8], strides = [1, 1]} : vector<12x9xf32> to vector<12x8xf32>
    %11 = vector.extract_strided_slice %9 {offsets = [0, 8], sizes = [12, 1], strides = [1, 1]} : vector<12x9xf32> to vector<12x1xf32>
    %c0_2 = arith.constant 0 : index
    %c0_3 = arith.constant 0 : index
    %12 = vector.load %arg3[%c0_2, %c0_3] : memref<16x64xf32, #tpu.memory_space<vmem>>, vector<8x64xf32>
    %c8 = arith.constant 8 : index
    %c0_4 = arith.constant 0 : index
    %13 = vector.load %arg3[%c8, %c0_4] : memref<16x64xf32, #tpu.memory_space<vmem>>, vector<8x64xf32>
    %c0_5 = arith.constant 0 : index
    %c0_6 = arith.constant 0 : index
    %14 = vector.load %arg1[%c0_5, %c0_6] : memref<64x128xf32, #tpu.memory_space<vmem>>, vector<64x128xf32>
    %15 = arith.truncf %14 : vector<64x128xf32> to vector<64x128xbf16>
    %c0_7 = arith.constant 0 : index
    %c0_8 = arith.constant 0 : index
    %16 = vector.load %arg4[%c0_7, %c0_8] : memref<128x256xbf16, #tpu.memory_space<vmem>>, vector<128x256xbf16>
    %cst_9 = arith.constant dense<0.000000e+00> : vector<64x256xf32>
    %17 = tpu.matmul %15, %16, %cst_9 {dimension_numbers = #tpu.dot_dimension_numbers<[1], [0], [0], [1], [0, 0, 1, 1], [], []>} : vector<64x128xbf16>, vector<128x256xbf16>, vector<64x256xf32> -> vector<64x256xf32>
    %18 = arith.truncf %17 : vector<64x256xf32> to vector<64x256xbf16>
    %cst_10 = arith.constant dense<0.000000e+00> : vector<12x64xf32>
    %19 = tpu.matmul %10, %12, %cst_10 {dimension_numbers = #tpu.dot_dimension_numbers<[1], [0], [0], [1], [0, 0, 1, 1], [], []>, precision = #tpu.contract_precision<fp32>} : vector<12x8xf32>, vector<8x64xf32>, vector<12x64xf32> -> vector<12x64xf32>
    %20 = vector.shape_cast %19 : vector<12x64xf32> to vector<12x1x64xf32>
    %21 = vector.shape_cast %13 : vector<8x64xf32> to vector<1x8x64xf32>
    %22 = vector.broadcast %20 : vector<12x1x64xf32> to vector<12x8x64xf32>
    %23 = vector.broadcast %21 : vector<1x8x64xf32> to vector<12x8x64xf32>
    %24 = arith.mulf %22, %23 : vector<12x8x64xf32>
    %25 = vector.shape_cast %11 : vector<12x1xf32> to vector<12x1x1xf32>
    %26 = vector.shape_cast %25 : vector<12x1x1xf32> to vector<12x1x1xf32>
    %27 = vector.broadcast %26 : vector<12x1x1xf32> to vector<12x8x1xf32>
    %28 = vector.extract_strided_slice %24 {offsets = [0, 0, 0], sizes = [6, 8, 64], strides = [1, 1, 1]} : vector<12x8x64xf32> to vector<6x8x64xf32>
    %29 = vector.shape_cast %28 : vector<6x8x64xf32> to vector<48x64xf32>
    %30 = arith.truncf %29 : vector<48x64xf32> to vector<48x64xbf16>
    %31 = arith.extf %30 : vector<48x64xbf16> to vector<48x64xf32>
    %32 = arith.subf %29, %31 : vector<48x64xf32>
    %33 = arith.truncf %32 : vector<48x64xf32> to vector<48x64xbf16>
    %cst_11 = arith.constant dense<0.000000e+00> : vector<48x256xf32>
    %34 = tpu.matmul %30, %18, %cst_11 {dimension_numbers = #tpu.dot_dimension_numbers<[1], [0], [0], [1], [0, 0, 1, 1], [], []>} : vector<48x64xbf16>, vector<64x256xbf16>, vector<48x256xf32> -> vector<48x256xf32>
    %cst_12 = arith.constant dense<0.000000e+00> : vector<48x256xf32>
    %35 = tpu.matmul %33, %18, %cst_12 {dimension_numbers = #tpu.dot_dimension_numbers<[1], [0], [0], [1], [0, 0, 1, 1], [], []>} : vector<48x64xbf16>, vector<64x256xbf16>, vector<48x256xf32> -> vector<48x256xf32>
    %36 = arith.addf %34, %35 : vector<48x256xf32>
    %37 = vector.extract_strided_slice %27 {offsets = [0, 0, 0], sizes = [6, 8, 1], strides = [1, 1, 1]} : vector<12x8x1xf32> to vector<6x8x1xf32>
    %38 = vector.shape_cast %37 : vector<6x8x1xf32> to vector<48x1xf32>
    %39 = vector.extract_strided_slice %36 {offsets = [0, 0], sizes = [48, 128], strides = [1, 1]} : vector<48x256xf32> to vector<48x128xf32>
    %40 = vector.broadcast %38 : vector<48x1xf32> to vector<48x128xf32>
    %41 = arith.addf %39, %40 : vector<48x128xf32>
    %42 = vector.extract_strided_slice %36 {offsets = [0, 128], sizes = [48, 128], strides = [1, 1]} : vector<48x256xf32> to vector<48x128xf32>
    %43 = vector.extract_strided_slice %41 {offsets = [0, 0], sizes = [8, 128], strides = [1, 1]} : vector<48x128xf32> to vector<8x128xf32>
    %44 = vector.extract_strided_slice %42 {offsets = [0, 0], sizes = [8, 128], strides = [1, 1]} : vector<48x128xf32> to vector<8x128xf32>
    %45 = vector.extract_strided_slice %41 {offsets = [8, 0], sizes = [8, 128], strides = [1, 1]} : vector<48x128xf32> to vector<8x128xf32>
    %46 = vector.extract_strided_slice %42 {offsets = [8, 0], sizes = [8, 128], strides = [1, 1]} : vector<48x128xf32> to vector<8x128xf32>
    %47 = arith.mulf %43, %45 : vector<8x128xf32>
    %48 = arith.mulf %44, %46 : vector<8x128xf32>
    %49 = arith.subf %47, %48 : vector<8x128xf32>
    %50 = arith.mulf %43, %46 : vector<8x128xf32>
    %51 = arith.mulf %44, %45 : vector<8x128xf32>
    %52 = arith.addf %50, %51 : vector<8x128xf32>
    %53 = vector.extract_strided_slice %41 {offsets = [16, 0], sizes = [8, 128], strides = [1, 1]} : vector<48x128xf32> to vector<8x128xf32>
    %54 = vector.extract_strided_slice %42 {offsets = [16, 0], sizes = [8, 128], strides = [1, 1]} : vector<48x128xf32> to vector<8x128xf32>
    %55 = vector.extract_strided_slice %41 {offsets = [24, 0], sizes = [8, 128], strides = [1, 1]} : vector<48x128xf32> to vector<8x128xf32>
    %56 = vector.extract_strided_slice %42 {offsets = [24, 0], sizes = [8, 128], strides = [1, 1]} : vector<48x128xf32> to vector<8x128xf32>
    %57 = arith.mulf %53, %55 : vector<8x128xf32>
    %58 = arith.mulf %54, %56 : vector<8x128xf32>
    %59 = arith.subf %57, %58 : vector<8x128xf32>
    %60 = arith.mulf %53, %56 : vector<8x128xf32>
    %61 = arith.mulf %54, %55 : vector<8x128xf32>
    %62 = arith.addf %60, %61 : vector<8x128xf32>
    %63 = vector.extract_strided_slice %41 {offsets = [32, 0], sizes = [8, 128], strides = [1, 1]} : vector<48x128xf32> to vector<8x128xf32>
    %64 = vector.extract_strided_slice %42 {offsets = [32, 0], sizes = [8, 128], strides = [1, 1]} : vector<48x128xf32> to vector<8x128xf32>
    %65 = vector.extract_strided_slice %41 {offsets = [40, 0], sizes = [8, 128], strides = [1, 1]} : vector<48x128xf32> to vector<8x128xf32>
    %66 = vector.extract_strided_slice %42 {offsets = [40, 0], sizes = [8, 128], strides = [1, 1]} : vector<48x128xf32> to vector<8x128xf32>
    %67 = arith.mulf %63, %65 : vector<8x128xf32>
    %68 = arith.mulf %64, %66 : vector<8x128xf32>
    %69 = arith.subf %67, %68 : vector<8x128xf32>
    %70 = arith.mulf %63, %66 : vector<8x128xf32>
    %71 = arith.mulf %64, %65 : vector<8x128xf32>
    %72 = arith.addf %70, %71 : vector<8x128xf32>
    %73 = arith.mulf %49, %59 : vector<8x128xf32>
    %74 = arith.mulf %52, %62 : vector<8x128xf32>
    %75 = arith.subf %73, %74 : vector<8x128xf32>
    %76 = arith.mulf %49, %62 : vector<8x128xf32>
    %77 = arith.mulf %52, %59 : vector<8x128xf32>
    %78 = arith.addf %76, %77 : vector<8x128xf32>
    %79 = arith.mulf %75, %69 : vector<8x128xf32>
    %80 = arith.mulf %78, %72 : vector<8x128xf32>
    %81 = arith.subf %79, %80 : vector<8x128xf32>
    %82 = arith.mulf %75, %72 : vector<8x128xf32>
    %83 = arith.mulf %78, %69 : vector<8x128xf32>
    %84 = arith.addf %82, %83 : vector<8x128xf32>
    %85 = vector.extract_strided_slice %24 {offsets = [6, 0, 0], sizes = [6, 8, 64], strides = [1, 1, 1]} : vector<12x8x64xf32> to vector<6x8x64xf32>
    %86 = vector.shape_cast %85 : vector<6x8x64xf32> to vector<48x64xf32>
    %87 = arith.truncf %86 : vector<48x64xf32> to vector<48x64xbf16>
    %88 = arith.extf %87 : vector<48x64xbf16> to vector<48x64xf32>
    %89 = arith.subf %86, %88 : vector<48x64xf32>
    %90 = arith.truncf %89 : vector<48x64xf32> to vector<48x64xbf16>
    %cst_13 = arith.constant dense<0.000000e+00> : vector<48x256xf32>
    %91 = tpu.matmul %87, %18, %cst_13 {dimension_numbers = #tpu.dot_dimension_numbers<[1], [0], [0], [1], [0, 0, 1, 1], [], []>} : vector<48x64xbf16>, vector<64x256xbf16>, vector<48x256xf32> -> vector<48x256xf32>
    %cst_14 = arith.constant dense<0.000000e+00> : vector<48x256xf32>
    %92 = tpu.matmul %90, %18, %cst_14 {dimension_numbers = #tpu.dot_dimension_numbers<[1], [0], [0], [1], [0, 0, 1, 1], [], []>} : vector<48x64xbf16>, vector<64x256xbf16>, vector<48x256xf32> -> vector<48x256xf32>
    %93 = arith.addf %91, %92 : vector<48x256xf32>
    %94 = vector.extract_strided_slice %27 {offsets = [6, 0, 0], sizes = [6, 8, 1], strides = [1, 1, 1]} : vector<12x8x1xf32> to vector<6x8x1xf32>
    %95 = vector.shape_cast %94 : vector<6x8x1xf32> to vector<48x1xf32>
    %96 = vector.extract_strided_slice %93 {offsets = [0, 0], sizes = [48, 128], strides = [1, 1]} : vector<48x256xf32> to vector<48x128xf32>
    %97 = vector.broadcast %95 : vector<48x1xf32> to vector<48x128xf32>
    %98 = arith.addf %96, %97 : vector<48x128xf32>
    %99 = vector.extract_strided_slice %93 {offsets = [0, 128], sizes = [48, 128], strides = [1, 1]} : vector<48x256xf32> to vector<48x128xf32>
    %100 = vector.extract_strided_slice %98 {offsets = [0, 0], sizes = [8, 128], strides = [1, 1]} : vector<48x128xf32> to vector<8x128xf32>
    %101 = vector.extract_strided_slice %99 {offsets = [0, 0], sizes = [8, 128], strides = [1, 1]} : vector<48x128xf32> to vector<8x128xf32>
    %102 = vector.extract_strided_slice %98 {offsets = [8, 0], sizes = [8, 128], strides = [1, 1]} : vector<48x128xf32> to vector<8x128xf32>
    %103 = vector.extract_strided_slice %99 {offsets = [8, 0], sizes = [8, 128], strides = [1, 1]} : vector<48x128xf32> to vector<8x128xf32>
    %104 = arith.mulf %100, %102 : vector<8x128xf32>
    %105 = arith.mulf %101, %103 : vector<8x128xf32>
    %106 = arith.subf %104, %105 : vector<8x128xf32>
    %107 = arith.mulf %100, %103 : vector<8x128xf32>
    %108 = arith.mulf %101, %102 : vector<8x128xf32>
    %109 = arith.addf %107, %108 : vector<8x128xf32>
    %110 = vector.extract_strided_slice %98 {offsets = [16, 0], sizes = [8, 128], strides = [1, 1]} : vector<48x128xf32> to vector<8x128xf32>
    %111 = vector.extract_strided_slice %99 {offsets = [16, 0], sizes = [8, 128], strides = [1, 1]} : vector<48x128xf32> to vector<8x128xf32>
    %112 = vector.extract_strided_slice %98 {offsets = [24, 0], sizes = [8, 128], strides = [1, 1]} : vector<48x128xf32> to vector<8x128xf32>
    %113 = vector.extract_strided_slice %99 {offsets = [24, 0], sizes = [8, 128], strides = [1, 1]} : vector<48x128xf32> to vector<8x128xf32>
    %114 = arith.mulf %110, %112 : vector<8x128xf32>
    %115 = arith.mulf %111, %113 : vector<8x128xf32>
    %116 = arith.subf %114, %115 : vector<8x128xf32>
    %117 = arith.mulf %110, %113 : vector<8x128xf32>
    %118 = arith.mulf %111, %112 : vector<8x128xf32>
    %119 = arith.addf %117, %118 : vector<8x128xf32>
    %120 = vector.extract_strided_slice %98 {offsets = [32, 0], sizes = [8, 128], strides = [1, 1]} : vector<48x128xf32> to vector<8x128xf32>
    %121 = vector.extract_strided_slice %99 {offsets = [32, 0], sizes = [8, 128], strides = [1, 1]} : vector<48x128xf32> to vector<8x128xf32>
    %122 = vector.extract_strided_slice %98 {offsets = [40, 0], sizes = [8, 128], strides = [1, 1]} : vector<48x128xf32> to vector<8x128xf32>
    %123 = vector.extract_strided_slice %99 {offsets = [40, 0], sizes = [8, 128], strides = [1, 1]} : vector<48x128xf32> to vector<8x128xf32>
    %124 = arith.mulf %120, %122 : vector<8x128xf32>
    %125 = arith.mulf %121, %123 : vector<8x128xf32>
    %126 = arith.subf %124, %125 : vector<8x128xf32>
    %127 = arith.mulf %120, %123 : vector<8x128xf32>
    %128 = arith.mulf %121, %122 : vector<8x128xf32>
    %129 = arith.addf %127, %128 : vector<8x128xf32>
    %130 = arith.mulf %106, %116 : vector<8x128xf32>
    %131 = arith.mulf %109, %119 : vector<8x128xf32>
    %132 = arith.subf %130, %131 : vector<8x128xf32>
    %133 = arith.mulf %106, %119 : vector<8x128xf32>
    %134 = arith.mulf %109, %116 : vector<8x128xf32>
    %135 = arith.addf %133, %134 : vector<8x128xf32>
    %136 = arith.mulf %132, %126 : vector<8x128xf32>
    %137 = arith.mulf %135, %129 : vector<8x128xf32>
    %138 = arith.subf %136, %137 : vector<8x128xf32>
    %139 = arith.mulf %132, %129 : vector<8x128xf32>
    %140 = arith.mulf %135, %126 : vector<8x128xf32>
    %141 = arith.addf %139, %140 : vector<8x128xf32>
    %142 = arith.mulf %81, %138 : vector<8x128xf32>
    %143 = arith.mulf %84, %141 : vector<8x128xf32>
    %144 = arith.addf %142, %143 : vector<8x128xf32>
    %145 = arith.mulf %84, %138 : vector<8x128xf32>
    %146 = arith.mulf %81, %141 : vector<8x128xf32>
    %147 = arith.subf %145, %146 : vector<8x128xf32>
    %148 = tpu.concatenate %144, %147 in 1 : vector<8x128xf32>, vector<8x128xf32> -> vector<8x256xf32>
    %149 = arith.truncf %148 : vector<8x256xf32> to vector<8x256xbf16>
    %c0_15 = arith.constant 0 : index
    %c0_16 = arith.constant 0 : index
    %150 = vector.load %arg5[%c0_15, %c0_16] : memref<256x128xbf16, #tpu.memory_space<vmem>>, vector<256x128xbf16>
    %cst_17 = arith.constant dense<0.000000e+00> : vector<8x128xf32>
    %151 = tpu.matmul %149, %150, %cst_17 {dimension_numbers = #tpu.dot_dimension_numbers<[1], [0], [0], [1], [0, 0, 1, 1], [], []>} : vector<8x256xbf16>, vector<256x128xbf16>, vector<8x128xf32> -> vector<8x128xf32>
    %c0_18 = arith.constant 0 : index
    %c0_19 = arith.constant 0 : index
    %152 = vector.load %arg6[%c0_18, %c0_19] : memref<8x128xf32, #tpu.memory_space<vmem>>, vector<8x128xf32>
    tpu.vector_store %arg6[%c0_18, %c0_19], %151 {strides = array<i32>} : memref<8x128xf32, #tpu.memory_space<vmem>>, vector<8x128xf32>,
    return
  }
  func.func @transform_0(%arg0: i32) -> (i32, i32) {
    %c0_i32 = arith.constant 0 : i32
    %c0_i32_0 = arith.constant 0 : i32
    return %arg0, %c0_i32 : i32, i32
  }
  func.func @transform_1(%arg0: i32) -> (i32, i32) {
    %c0_i32 = arith.constant 0 : i32
    %c0_i32_0 = arith.constant 0 : i32
    %c0_i32_1 = arith.constant 0 : i32
    return %c0_i32, %c0_i32_0 : i32, i32
  }
  func.func @transform_2(%arg0: i32) -> (i32, i32) {
    %c0_i32 = arith.constant 0 : i32
    %c0_i32_0 = arith.constant 0 : i32
    %c0_i32_1 = arith.constant 0 : i32
    return %c0_i32, %c0_i32_0 : i32, i32
  }
  func.func @transform_3(%arg0: i32) -> (i32, i32) {
    %c0_i32 = arith.constant 0 : i32
    %c0_i32_0 = arith.constant 0 : i32
    %c0_i32_1 = arith.constant 0 : i32
    return %c0_i32, %c0_i32_0 : i32, i32
  }
  func.func @transform_4(%arg0: i32) -> (i32, i32) {
    %c0_i32 = arith.constant 0 : i32
    %c0_i32_0 = arith.constant 0 : i32
    %c0_i32_1 = arith.constant 0 : i32
    return %c0_i32, %c0_i32_0 : i32, i32
  }
  func.func @transform_5(%arg0: i32) -> (i32, i32) {
    %c0_i32 = arith.constant 0 : i32
    %c0_i32_0 = arith.constant 0 : i32
    return %arg0, %c0_i32 : i32, i32
  }
}

</mosaic_0001>

<llo_original>
// kernel: iraven_formula.1
$region0: #{iraven_formula.1}
  #allocation0 [shape = 'u32[]', space=smem, size = 0x4, offset = 0x4, fixed_abs, tag = 'smem constant byte address 0x4 - core index']
  #allocation1 [shape = 'u32[144,128]{1,0:T(1,128)}', space=vmem, size = 0x12000, scoped, tag = 'internal scratch']
  %s0 = inlined_call_operand.vmem [shape: f32[128,128], index: 0, kind: input, shape index: {}]
  %s1 = inlined_call_operand.vmem [shape: f32[12,9], index: 1, kind: input, shape index: {}]
  %s2 = inlined_call_operand.vmem [shape: f32[16,64], index: 2, kind: input, shape index: {}]
  %s3 = inlined_call_operand.vmem [shape: bf16[128,256], index: 3, kind: input, shape index: {}]
  %s4 = inlined_call_operand.vmem [shape: bf16[256,128], index: 4, kind: input, shape index: {}]
  %s5 = inlined_call_operand.vmem [shape: f32[16,128], index: 5, kind: output, shape index: {}]
  %s6 = sld [smem:[#allocation0]]
  $region53: #{iraven_formula.1} parent=0
    _
  %s8 = ssub.s32 1, %s6
  %s9 = scalar_select 0, %s8, %s6
  loop: start=0, step=1, limit=4
  $region2: #{iraven_formula.1} parent=0 // loop_pre_header
    _
  $region3: #{iraven_formula.1} parent=0 // loop_header
    %s11 = sphi 0, %s15
    %p12 = scmp.ge.s32.totalorder %s11, 4
    %s21 = sphi 0, %s23
    %s24 = sphi 0, %s21
    %s25 = sphi 0, %s24
    %s41 = sphi 0, %s25
    %s45 = sphi 0, %s45
    %s47 = sphi 0, %s45
    %s48 = sphi 0, %s47
    %s62 = sphi 0, %s48
    %s66 = sphi 0, %s66
    %s68 = sphi 0, %s66
    %s69 = sphi 0, %s68
    %s83 = sphi 0, %s69
    %s87 = sphi 0, %s87
    %s89 = sphi 0, %s87
    %s90 = sphi 0, %s89
    %s104 = sphi 0, %s90
    %s108 = sphi 0, %s108
    %s110 = sphi 0, %s108
    %s111 = sphi 0, %s110
    %s125 = sphi 0, %s111
    %s131 = sphi 0, %s133
    %s134 = sphi 0, %s131
    %s135 = sphi 0, %s134
    %s151 = sphi 0, %s135
  $region4: #{iraven_formula.1} parent=0 // loop_header_branch
    %14 = sbr.rel (%p12) target = $region8
  $region5: #{iraven_formula.1} parent=0 // loop_body
    %s16 = ssub.s32 %s11, 1
    %s17 = ssub.s32 %s11, 2
    %s18 = sadd.s32 %s11, 1
    %s19 = ssub.s32 %s11, %s18
    %p20 = scmp.eq.s32.totalorder %s19, 0
    %s22 = sadd.s32 %s21, 1
    %s23 = scalar_select %p20, %s21, %s22
    %p26 = pneg %p20
    %p27 = scmp.eq.s32.totalorder %s11, 1
    %p28 = por %p26, %p27
    %p29 = scmp.ne.s32.totalorder %s21, %s24
    %p30 = scmp.eq.s32.totalorder %s11, 0
    %p31 = por %p29, %p30
    %p32 = scmp.ne.s32.totalorder %s21, %s24
    %p33 = scmp.eq.s32.totalorder %s16, 1
    %p34 = por %p32, %p33
    %p35 = scmp.ne.s32.totalorder %s24, %s25
    %p36 = scmp.eq.s32.totalorder %s16, 0
    %p37 = por %p35, %p36
    %p38 = scmp.ne.s32.totalorder %s24, %s25
    %p39 = scmp.eq.s32.totalorder %s17, 1
    %p40 = por %p38, %p39
    %p42 = scmp.ne.s32.totalorder %s25, %s41
    %p43 = scmp.eq.s32.totalorder %s17, 0
    %p44 = por %p42, %p43
    %s46 = sadd.s32 %s45, 1
    %p49 = scmp.eq.s32.totalorder %s11, 1
    %p50 = scmp.ne.s32.totalorder %s45, %s47
    %p51 = scmp.eq.s32.totalorder %s11, 0
    %p52 = por %p50, %p51
    %p53 = scmp.ne.s32.totalorder %s45, %s47
    %p54 = scmp.eq.s32.totalorder %s16, 1
    %p55 = por %p53, %p54
    %p56 = scmp.ne.s32.totalorder %s47, %s48
    %p57 = scmp.eq.s32.totalorder %s16, 0
    %p58 = por %p56, %p57
    %p59 = scmp.ne.s32.totalorder %s47, %s48
    %p60 = scmp.eq.s32.totalorder %s17, 1
    %p61 = por %p59, %p60
    %p63 = scmp.ne.s32.totalorder %s48, %s62
    %p64 = scmp.eq.s32.totalorder %s17, 0
    %p65 = por %p63, %p64
    %s67 = sadd.s32 %s66, 1
    %p70 = scmp.eq.s32.totalorder %s11, 1
    %p71 = scmp.ne.s32.totalorder %s66, %s68
    %p72 = scmp.eq.s32.totalorder %s11, 0
    %p73 = por %p71, %p72
    %p74 = scmp.ne.s32.totalorder %s66, %s68
    %p75 = scmp.eq.s32.totalorder %s16, 1
    %p76 = por %p74, %p75
    %p77 = scmp.ne.s32.totalorder %s68, %s69
    %p78 = scmp.eq.s32.totalorder %s16, 0
    %p79 = por %p77, %p78
    %p80 = scmp.ne.s32.totalorder %s68, %s69
    %p81 = scmp.eq.s32.totalorder %s17, 1
    %p82 = por %p80, %p81
    %p84 = scmp.ne.s32.totalorder %s69, %s83
    %p85 = scmp.eq.s32.totalorder %s17, 0
    %p86 = por %p84, %p85
    %s88 = sadd.s32 %s87, 1
    %p91 = scmp.eq.s32.totalorder %s11, 1
    %p92 = scmp.ne.s32.totalorder %s87, %s89
    %p93 = scmp.eq.s32.totalorder %s11, 0
    %p94 = por %p92, %p93
    %p95 = scmp.ne.s32.totalorder %s87, %s89
    %p96 = scmp.eq.s32.totalorder %s16, 1
    %p97 = por %p95, %p96
    %p98 = scmp.ne.s32.totalorder %s89, %s90
    %p99 = scmp.eq.s32.totalorder %s16, 0
    %p100 = por %p98, %p99
    %p101 = scmp.ne.s32.totalorder %s89, %s90
    %p102 = scmp.eq.s32.totalorder %s17, 1
    %p103 = por %p101, %p102
    %p105 = scmp.ne.s32.totalorder %s90, %s104
    %p106 = scmp.eq.s32.totalorder %s17, 0
    %p107 = por %p105, %p106
    %s109 = sadd.s32 %s108, 1
    %p112 = scmp.eq.s32.totalorder %s11, 1
    %p113 = scmp.ne.s32.totalorder %s108, %s110
    %p114 = scmp.eq.s32.totalorder %s11, 0
    %p115 = por %p113, %p114
    %p116 = scmp.ne.s32.totalorder %s108, %s110
    %p117 = scmp.eq.s32.totalorder %s16, 1
    %p118 = por %p116, %p117
    %p119 = scmp.ne.s32.totalorder %s110, %s111
    %p120 = scmp.eq.s32.totalorder %s16, 0
    %p121 = por %p119, %p120
    %p122 = scmp.ne.s32.totalorder %s110, %s111
    %p123 = scmp.eq.s32.totalorder %s17, 1
    %p124 = por %p122, %p123
    %p126 = scmp.ne.s32.totalorder %s111, %s125
    %p127 = scmp.eq.s32.totalorder %s17, 0
    %p128 = por %p126, %p127
    %s129 = ssub.s32 %s11, %s18
    %p130 = scmp.eq.s32.totalorder %s129, 0
    %s132 = sadd.s32 %s131, 1
    %s133 = scalar_select %p130, %s131, %s132
    %p136 = pneg %p130
    %p137 = scmp.eq.s32.totalorder %s11, 1
    %p138 = por %p136, %p137
    %p139 = scmp.ne.s32.totalorder %s131, %s134
    %p140 = scmp.eq.s32.totalorder %s11, 0
    %p141 = por %p139, %p140
    %p142 = scmp.ne.s32.totalorder %s131, %s134
    %p143 = scmp.eq.s32.totalorder %s16, 1
    %p144 = por %p142, %p143
    %p145 = scmp.ne.s32.totalorder %s134, %s135
    %p146 = scmp.eq.s32.totalorder %s16, 0
    %p147 = por %p145, %p146
    %p148 = scmp.ne.s32.totalorder %s134, %s135
    %p149 = scmp.eq.s32.totalorder %s17, 1
    %p150 = por %p148, %p149
    %p152 = scmp.ne.s32.totalorder %s135, %s151
    %p153 = scmp.eq.s32.totalorder %s17, 0
    %p154 = por %p152, %p153
    %p155 = scmp.le.s32.totalorder 1, %s11
    %p156 = scmp.lt.s32.totalorder %s11, 3
    %p157 = pnand %p155, %p156
    %p158 = pneg %p157
    // Predicated region
    $region9: #{iraven_formula.1} parent=5 // pred_check
      _
    $region10: #{iraven_formula.1} parent=5 // pred_check_branch
      %160 = sbr.rel (%p157) target = $region12
    $region11: #{iraven_formula.1} parent=5 // pred_region
      %s161 = ssub.s32 %s11, 1
      // Predicated region
      $region13: #{iraven_formula.1} parent=11 // pred_check
        %p162 = pneg %p58
      $region14: #{iraven_formula.1} parent=11 // pred_check_branch
        %164 = sbr.rel (%p162) target = $region16
      $region15: #{iraven_formula.1} parent=11 // pred_region
        _
      $region16: #{iraven_formula.1} parent=11 // pred_fallthru
        _
      // Predicated region
      $region17: #{iraven_formula.1} parent=11 // pred_check
        %p165 = pneg %p79
      $region18: #{iraven_formula.1} parent=11 // pred_check_branch
        %167 = sbr.rel (%p165) target = $region20
      $region19: #{iraven_formula.1} parent=11 // pred_region
        _
      $region20: #{iraven_formula.1} parent=11 // pred_fallthru
        _
      // Predicated region
      $region21: #{iraven_formula.1} parent=11 // pred_check
        %p168 = pneg %p100
      $region22: #{iraven_formula.1} parent=11 // pred_check_branch
        %170 = sbr.rel (%p168) target = $region24
      $region23: #{iraven_formula.1} parent=11 // pred_region
        _
      $region24: #{iraven_formula.1} parent=11 // pred_fallthru
        _
      // Predicated region
      $region25: #{iraven_formula.1} parent=11 // pred_check
        %p171 = pneg %p121
      $region26: #{iraven_formula.1} parent=11 // pred_check_branch
        %173 = sbr.rel (%p171) target = $region28
      $region27: #{iraven_formula.1} parent=11 // pred_region
        _
      $region28: #{iraven_formula.1} parent=11 // pred_fallthru
        _
    $region12: #{iraven_formula.1} parent=5 // pred_fallthru
      _
    %p174 = scmp.lt.s32.totalorder %s11, 2
    // Predicated region
    $region29: #{iraven_formula.1} parent=5 // pred_check
      %p175 = pneg %p174
    $region30: #{iraven_formula.1} parent=5 // pred_check_branch
      %177 = sbr.rel (%p175) target = $region32
    $region31: #{iraven_formula.1} parent=5 // pred_region
      // Predicated region
      $region33: #{iraven_formula.1} parent=31 // pred_check
        %p178 = pneg %p31
      $region34: #{iraven_formula.1} parent=31 // pred_check_branch
        %180 = sbr.rel (%p178) target = $region36
      $region35: #{iraven_formula.1} parent=31 // pred_region
        %s181 = smul.u32 8, %s11
        %p182 = scmp.lt.s32.totalorder %s181, 15
        %s183 = scalar_select %p182, %s181, 15
        %s184 = smul.addr %s183, 8
        %s185 = scalar_lea.vmem %s0, %s184
        %s186 = smul.u32 8, %s11
      $region36: #{iraven_formula.1} parent=31 // pred_fallthru
        _
    $region32: #{iraven_formula.1} parent=5 // pred_fallthru
      _
    %p187 = scmp.le.s32.totalorder 1, %s11
    %p188 = scmp.lt.s32.totalorder %s11, 3
    %p189 = pnand %p187, %p188
    %p190 = pneg %p189
    // Predicated region
    $region37: #{iraven_formula.1} parent=5 // pred_check
      _
    $region38: #{iraven_formula.1} parent=5 // pred_check_branch
      %192 = sbr.rel (%p189) target = $region40
    $region39: #{iraven_formula.1} parent=5 // pred_region
      %s193 = ssub.s32 %s11, 1
      %s194 = smul.u32 8, %s16
      %p195 = scmp.lt.s32.totalorder %s194, 15
      %s196 = scalar_select %p195, %s194, 15
      %s197 = smul.addr %s196, 8
      %s198 = scalar_lea.vmem %s0, %s197
      %p199 = pneg %p37
      %p200 = pneg %p34
      %p201 = pneg %p58
      %p202 = pneg %p55
      %p203 = pneg %p79
      %p204 = pneg %p76
      %p205 = pneg %p100
      %p206 = pneg %p97
      %p207 = pneg %p121
      %p208 = pneg %p118
      %p209 = pneg %p147
      %p210 = pneg %p144
      %p211 = scmp.lt.s32.totalorder %s16, 1
      %s212 = scalar_select %p211, %s16, 1
      %s213 = smul.addr %s212, 8
      %s214 = scalar_lea.vmem %s5, %s213
      %s215 = smul.u32 8, %s16
      %p216 = scmp.lt.s32.totalorder %s215, 15
      %s217 = scalar_select %p216, %s215, 15
      %s218 = smul.addr %s217, 8
      %s219 = scalar_lea.vmem %s0, %s218
      %s220 = smul.u32 8, %s16
      %p221 = scmp.lt.s32.totalorder %s16, 1
      %s222 = scalar_select %p221, %s16, 1
      %s223 = smul.addr %s222, 8
      %s224 = scalar_lea.vmem %s5, %s223
      %v226 = vld [vmem:[%s1] sm:$0xff]
      %v227 = vld [vmem:[%s1 + $0x8] sm:$0xf]
      %vm228 = vcmask 72704
      %v229 = vsel %vm228, %v226, -inf
      %230 = vmax.xlane.f32.xlu0 %v229
      %v231 = vpop.xlane.xlu0 %230
      %vm232 = vcmask 68608
      %v233 = vsel %vm232, %v227, -inf
      %234 = vmax.xlane.f32.xlu0 %v233
      %v235 = vpop.xlane.xlu0 %234
      %v236 = vsub.f32 %v226, %v231
      %v237 = vsub.f32 %v227, %v235
      %v238 = vmul.f32 %v236, 1.442695
      %v239 = vpow.pop %v238
      %v240 = vmul.f32 %v237, 1.442695
      %v241 = vpow.pop %v240
      %v242 = vsel %vm228, %v239, 0.0
      %243 = vadd.xlane.f32.xlu0 %v242
      %v244 = vpop.xlane.xlu0 %243
      %v245 = vsel %vm232, %v241, 0.0
      %246 = vadd.xlane.f32.xlu0 %v245
      %v247 = vpop.xlane.xlu0 %246
      %v248 = vrcp.pop %v244
      %v249 = vmul.f32 %v239, %v248
      %v250 = vrcp.pop %v247
      %v251 = vmul.f32 %v241, %v250
      %v252 = vld [vmem:[%s2] sm:$0xff]
      %v253 = vld [vmem:[%s2 + $0x8] sm:$0xff]
      %v254 = vld [vmem:[%s219] sm:$0xff]
      %v255 = vld [vmem:[%s219 + $0x8] sm:$0xff]
      %v256 = vld [vmem:[%s219 + $0x10] sm:$0xff]
      %v257 = vld [vmem:[%s219 + $0x18] sm:$0xff]
      %v258 = vld [vmem:[%s219 + $0x20] sm:$0xff]
      %v259 = vld [vmem:[%s219 + $0x28] sm:$0xff]
      %v260 = vld [vmem:[%s219 + $0x30] sm:$0xff]
      %v261 = vld [vmem:[%s219 + $0x38] sm:$0xff]
      %v262 = vpack.c.bf16 %v255, %v254
      %v263 = vpack.c.bf16 %v257, %v256
      %v264 = vpack.c.bf16 %v259, %v258
      %v265 = vpack.c.bf16 %v261, %v260
      %v266 = vld [vmem:[%s3] sm:$0xff]
      %v267 = vld [vmem:[%s3 + $0x8] sm:$0xff]
      %v268 = vld [vmem:[%s3 + $0x10] sm:$0xff]
      %v269 = vld [vmem:[%s3 + $0x18] sm:$0xff]
      %v270 = vld [vmem:[%s3 + $0x20] sm:$0xff]
      %v271 = vld [vmem:[%s3 + $0x28] sm:$0xff]
      %v272 = vld [vmem:[%s3 + $0x30] sm:$0xff]
      %v273 = vld [vmem:[%s3 + $0x38] sm:$0xff]
      %v274 = vld [vmem:[%s3 + $0x40] sm:$0xff]
      %v275 = vld [vmem:[%s3 + $0x48] sm:$0xff]
      %v276 = vld [vmem:[%s3 + $0x50] sm:$0xff]
      %v277 = vld [vmem:[%s3 + $0x58] sm:$0xff]
      %v278 = vld [vmem:[%s3 + $0x60] sm:$0xff]
      %v279 = vld [vmem:[%s3 + $0x68] sm:$0xff]
      %v280 = vld [vmem:[%s3 + $0x70] sm:$0xff]
      %v281 = vld [vmem:[%s3 + $0x78] sm:$0xff]
      %v298 = vunpack.c.l.b16 %v266
      %v299 = vunpack.c.h.b16 %v266
      %v300 = vunpack.c.l.b16 %v267
      %v301 = vunpack.c.h.b16 %v267
      %v302 = vunpack.c.l.b16 %v268
      %v303 = vunpack.c.h.b16 %v268
      %v304 = vunpack.c.l.b16 %v269
      %v305 = vunpack.c.h.b16 %v269
      %v306 = vunpack.c.l.b16 %v270
      %v307 = vunpack.c.h.b16 %v270
      %v308 = vunpack.c.l.b16 %v271
      %v309 = vunpack.c.h.b16 %v271
      %v310 = vunpack.c.l.b16 %v272
      %v311 = vunpack.c.h.b16 %v272
      %v312 = vunpack.c.l.b16 %v273
      %v313 = vunpack.c.h.b16 %v273
      %v314 = vunpack.c.l.b16 %v274
      %v315 = vunpack.c.h.b16 %v274
      %v316 = vunpack.c.l.b16 %v275
      %v317 = vunpack.c.h.b16 %v275
      %v318 = vunpack.c.l.b16 %v276
      %v319 = vunpack.c.h.b16 %v276
      %v320 = vunpack.c.l.b16 %v277
      %v321 = vunpack.c.h.b16 %v277
      %v322 = vunpack.c.l.b16 %v278
      %v323 = vunpack.c.h.b16 %v278
      %v324 = vunpack.c.l.b16 %v279
      %v325 = vunpack.c.h.b16 %v279
      %v326 = vunpack.c.l.b16 %v280
      %v327 = vunpack.c.h.b16 %v280
      %v328 = vunpack.c.l.b16 %v281
      %v329 = vunpack.c.h.b16 %v281
      %v330 = vpack.c.b16 %v300, %v298
      %v331 = vpack.c.b16 %v301, %v299
      %v332 = vpack.c.b16 %v304, %v302
      %v333 = vpack.c.b16 %v305, %v303
      %v334 = vpack.c.b16 %v308, %v306
      %v335 = vpack.c.b16 %v309, %v307
      %v336 = vpack.c.b16 %v312, %v310
      %v337 = vpack.c.b16 %v313, %v311
      %v338 = vpack.c.b16 %v316, %v314
      %v339 = vpack.c.b16 %v317, %v315
      %v340 = vpack.c.b16 %v320, %v318
      %v341 = vpack.c.b16 %v321, %v319
      %v342 = vpack.c.b16 %v324, %v322
      %v343 = vpack.c.b16 %v325, %v323
      %v344 = vpack.c.b16 %v328, %v326
      %v345 = vpack.c.b16 %v329, %v327
      %362 = vmatprep.subr.bf16.mxu0 %v331
      %363 = vmatpush1.bf16.msra.mxu0 %v330
      %364 = vmatprep.subr.bf16.mxu0 %v333
      %365 = vmatpush1.bf16.msra.mxu0 %v332
      %366 = vmatprep.subr.bf16.mxu0 %v335
      %367 = vmatpush1.bf16.msra.mxu0 %v334
      %368 = vmatprep.subr.bf16.mxu0 %v337
      %369 = vmatpush1.bf16.msra.mxu0 %v336
      %370 = vmatprep.subr.bf16.mxu0 %v339
      %371 = vmatpush1.bf16.msra.mxu0 %v338
      %372 = vmatprep.subr.bf16.mxu0 %v341
      %373 = vmatpush1.bf16.msra.mxu0 %v340
      %374 = vmatprep.subr.bf16.mxu0 %v343
      %375 = vmatpush1.bf16.msra.mxu0 %v342
      %376 = vmatprep.subr.bf16.mxu0 %v345
      %377 = vmatpush1.bf16.msra.mxu0 %v344
      %378 = vmatprep.subr.bf16.mxu0 0
      %379 = vmatpush1.bf16.msra.mxu0 0
      %380 = vmatprep.subr.bf16.mxu0 0
      %381 = vmatpush1.bf16.msra.mxu0 0
      %382 = vmatprep.subr.bf16.mxu0 0
      %383 = vmatpush1.bf16.msra.mxu0 0
      %384 = vmatprep.subr.bf16.mxu0 0
      %385 = vmatpush1.bf16.msra.mxu0 0
      %386 = vmatprep.subr.bf16.mxu0 0
      %387 = vmatpush1.bf16.msra.mxu0 0
      %388 = vmatprep.subr.bf16.mxu0 0
      %389 = vmatpush1.bf16.msra.mxu0 0
      %390 = vmatprep.subr.bf16.mxu0 0
      %391 = vmatpush1.bf16.msra.mxu0 0
      %392 = vmatprep.subr.bf16.mxu0 0
      %393 = vmatpush1.bf16.msra.mxu0 0
      %394 = vmatprep.mubr.bf16.mxu0 0
      %395 = vmatmul.mubr.bf16.gmra.mrb[0].mxu0 %v262
      %v396 = vpop.f32.mrb[0].mxu0
      %v397 = vadd.f32 0.0, %v396
      %v398 = vpop.f32.mrb[0].mxu0
      %v399 = vadd.f32 0.0, %v398
      %v400 = vpop.f32.mrb[0].mxu0
      %v401 = vadd.f32 0.0, %v400
      %v402 = vpop.f32.mrb[0].mxu0
      %v403 = vadd.f32 0.0, %v402
      %404 = vmatprep.mubr.bf16.mxu0 0
      %405 = vmatmul.mubr.bf16.gmra.mrb[0].mxu0 %v263
      %v406 = vpop.f32.mrb[0].mxu0
      %v407 = vadd.f32 0.0, %v406
      %v408 = vpop.f32.mrb[0].mxu0
      %v409 = vadd.f32 0.0, %v408
      %v410 = vpop.f32.mrb[0].mxu0
      %v411 = vadd.f32 0.0, %v410
      %v412 = vpop.f32.mrb[0].mxu0
      %v413 = vadd.f32 0.0, %v412
      %414 = vmatprep.mubr.bf16.mxu0 0
      %415 = vmatmul.mubr.bf16.gmra.mrb[0].mxu0 %v264
      %v416 = vpop.f32.mrb[0].mxu0
      %v417 = vadd.f32 0.0, %v416
      %v418 = vpop.f32.mrb[0].mxu0
      %v419 = vadd.f32 0.0, %v418
      %v420 = vpop.f32.mrb[0].mxu0
      %v421 = vadd.f32 0.0, %v420
      %v422 = vpop.f32.mrb[0].mxu0
      %v423 = vadd.f32 0.0, %v422
      %424 = vmatprep.mubr.bf16.mxu0 0
      %425 = vmatmul.mubr.bf16.gmra.mrb[0].mxu0 %v265
      %v426 = vpop.f32.mrb[0].mxu0
      %v427 = vadd.f32 0.0, %v426
      %v428 = vpop.f32.mrb[0].mxu0
      %v429 = vadd.f32 0.0, %v428
      %v430 = vpop.f32.mrb[0].mxu0
      %v431 = vadd.f32 0.0, %v430
      %v432 = vpop.f32.mrb[0].mxu0
      %v433 = vadd.f32 0.0, %v432
      %434 = vdwg.mxu0
      %v435 = vpack.c.bf16 %v401, %v397
      %v436 = vpack.c.bf16 %v403, %v399
      %v437 = vpack.c.bf16 %v411, %v407
      %v438 = vpack.c.bf16 %v413, %v409
      %v439 = vpack.c.bf16 %v421, %v417
      %v440 = vpack.c.bf16 %v423, %v419
      %v441 = vpack.c.bf16 %v431, %v427
      %v442 = vpack.c.bf16 %v433, %v429
      %vm443 = vcmask 64512
      %v445 = vsel %vm443, %v249, 0
      %v448 = vsel %vm443, %v251, 0
      %450 = vmatprep.subr.mxu0 0.0
      %v451 = vand.u32 %v252, 4294901760
      %452 = vmatpush1.msra.mxu0 %v451
      %453 = vmatprep.subr.mxu0 0.0
      %454 = vmatpush1.msra.mxu0 0.0
      %455 = vmatprep.subr.mxu0 0.0
      %456 = vmatpush1.msra.mxu0 0.0
      %457 = vmatprep.subr.mxu0 0.0
      %458 = vmatpush1.msra.mxu0 0.0
      %459 = vmatprep.subr.mxu0 0.0
      %460 = vmatpush1.msra.mxu0 0.0
      %461 = vmatprep.subr.mxu0 0.0
      %462 = vmatpush1.msra.mxu0 0.0
      %463 = vmatprep.subr.mxu0 0.0
      %464 = vmatpush1.msra.mxu0 0.0
      %465 = vmatprep.subr.mxu0 0.0
      %466 = vmatpush1.msra.mxu0 0.0
      %467 = vmatprep.subr.mxu0 0.0
      %468 = vmatpush1.msra.mxu0 0.0
      %469 = vmatprep.subr.mxu0 0.0
      %470 = vmatpush1.msra.mxu0 0.0
      %471 = vmatprep.subr.mxu0 0.0
      %472 = vmatpush1.msra.mxu0 0.0
      %473 = vmatprep.subr.mxu0 0.0
      %474 = vmatpush1.msra.mxu0 0.0
      %475 = vmatprep.subr.mxu0 0.0
      %476 = vmatpush1.msra.mxu0 0.0
      %477 = vmatprep.subr.mxu0 0.0
      %478 = vmatpush1.msra.mxu0 0.0
      %479 = vmatprep.subr.mxu0 0.0
      %480 = vmatpush1.msra.mxu0 0.0
      %481 = vmatprep.subr.mxu0 0.0
      %482 = vmatpush1.msra.mxu0 0.0
      %483 = vmatprep.subr.mxu0 0.0
      %484 = vmatpush1.msra.mxu0 0.0
      %485 = vmatprep.subr.mxu0 0.0
      %486 = vmatpush1.msra.mxu0 0.0
      %487 = vmatprep.subr.mxu0 0.0
      %488 = vmatpush1.msra.mxu0 0.0
      %489 = vmatprep.subr.mxu0 0.0
      %490 = vmatpush1.msra.mxu0 0.0
      %491 = vmatprep.subr.mxu0 0.0
      %492 = vmatpush1.msra.mxu0 0.0
      %493 = vmatprep.subr.mxu0 0.0
      %494 = vmatpush1.msra.mxu0 0.0
      %495 = vmatprep.subr.mxu0 0.0
      %496 = vmatpush1.msra.mxu0 0.0
      %497 = vmatprep.subr.mxu0 0.0
      %498 = vmatpush1.msra.mxu0 0.0
      %499 = vmatprep.subr.mxu0 0.0
      %500 = vmatpush1.msra.mxu0 0.0
      %501 = vmatprep.subr.mxu0 0.0
      %502 = vmatpush1.msra.mxu0 0.0
      %503 = vmatprep.subr.mxu0 0.0
      %504 = vmatpush1.msra.mxu0 0.0
      %505 = vmatprep.subr.mxu0 0.0
      %506 = vmatpush1.msra.mxu0 0.0
      %507 = vmatprep.subr.mxu0 0.0
      %508 = vmatpush1.msra.mxu0 0.0
      %509 = vmatprep.subr.mxu0 0.0
      %510 = vmatpush1.msra.mxu0 0.0
      %511 = vmatprep.subr.mxu0 0.0
      %512 = vmatpush1.msra.mxu0 0.0
      %513 = vmatprep.subr.mxu0 0.0
      %514 = vmatpush1.msra.mxu0 0.0
      %515 = vmatprep.mubr.f32.mxu0 0.0
      %v516 = vand.u32 %v445, 4294901760
      %v517 = vsub.f32 %v445, %v516
      %v518 = vand.u32 %v517, 4294901760
      %v519 = vsub.f32 %v517, %v518
      %v520 = vand.u32 %v519, 4294901760
      %521 = vmatmul.mubr.f32.gmra.mrb[0].mxu0 %v520
      %v522 = vpop.f32.mrb[0].mxu0
      %v523 = vadd.f32 0.0, %v522
      %v524 = vpop.f32.mrb[0].mxu0
      %525 = vmatprep.mubr.f32.mxu0 0.0
      %v526 = vand.u32 %v448, 4294901760
      %v527 = vsub.f32 %v448, %v526
      %v528 = vand.u32 %v527, 4294901760
      %v529 = vsub.f32 %v527, %v528
      %v530 = vand.u32 %v529, 4294901760
      %531 = vmatmul.mubr.f32.gmra.mrb[0].mxu0 %v530
      %v532 = vpop.f32.mrb[0].mxu0
      %v533 = vadd.f32 0.0, %v532
      %v534 = vpop.f32.mrb[0].mxu0
      %535 = vdwg.mxu0
      %536 = vmatprep.subr.mxu0 0.0
      %v537 = vand.u32 %v252, 4294901760
      %v538 = vsub.f32 %v252, %v537
      %v539 = vand.u32 %v538, 4294901760
      %v540 = vsub.f32 %v538, %v539
      %v541 = vand.u32 %v540, 4294901760
      %542 = vmatpush1.msra.mxu0 %v541
      %543 = vmatprep.subr.mxu0 0.0
      %544 = vmatpush1.msra.mxu0 0.0
      %545 = vmatprep.subr.mxu0 0.0
      %546 = vmatpush1.msra.mxu0 0.0
      %547 = vmatprep.subr.mxu0 0.0
      %548 = vmatpush1.msra.mxu0 0.0
      %549 = vmatprep.subr.mxu0 0.0
      %550 = vmatpush1.msra.mxu0 0.0
      %551 = vmatprep.subr.mxu0 0.0
      %552 = vmatpush1.msra.mxu0 0.0
      %553 = vmatprep.subr.mxu0 0.0
      %554 = vmatpush1.msra.mxu0 0.0
      %555 = vmatprep.subr.mxu0 0.0
      %556 = vmatpush1.msra.mxu0 0.0
      %557 = vmatprep.subr.mxu0 0.0
      %558 = vmatpush1.msra.mxu0 0.0
      %559 = vmatprep.subr.mxu0 0.0
      %560 = vmatpush1.msra.mxu0 0.0
      %561 = vmatprep.subr.mxu0 0.0
      %562 = vmatpush1.msra.mxu0 0.0
      %563 = vmatprep.subr.mxu0 0.0
      %564 = vmatpush1.msra.mxu0 0.0
      %565 = vmatprep.subr.mxu0 0.0
      %566 = vmatpush1.msra.mxu0 0.0
      %567 = vmatprep.subr.mxu0 0.0
      %568 = vmatpush1.msra.mxu0 0.0
      %569 = vmatprep.subr.mxu0 0.0
      %570 = vmatpush1.msra.mxu0 0.0
      %571 = vmatprep.subr.mxu0 0.0
      %572 = vmatpush1.msra.mxu0 0.0
      %573 = vmatprep.subr.mxu0 0.0
      %574 = vmatpush1.msra.mxu0 0.0
      %575 = vmatprep.subr.mxu0 0.0
      %576 = vmatpush1.msra.mxu0 0.0
      %577 = vmatprep.subr.mxu0 0.0
      %578 = vmatpush1.msra.mxu0 0.0
      %579 = vmatprep.subr.mxu0 0.0
      %580 = vmatpush1.msra.mxu0 0.0
      %581 = vmatprep.subr.mxu0 0.0
      %582 = vmatpush1.msra.mxu0 0.0
      %583 = vmatprep.subr.mxu0 0.0
      %584 = vmatpush1.msra.mxu0 0.0
      %585 = vmatprep.subr.mxu0 0.0
      %586 = vmatpush1.msra.mxu0 0.0
      %587 = vmatprep.subr.mxu0 0.0
      %588 = vmatpush1.msra.mxu0 0.0
      %589 = vmatprep.subr.mxu0 0.0
      %590 = vmatpush1.msra.mxu0 0.0
      %591 = vmatprep.subr.mxu0 0.0
      %592 = vmatpush1.msra.mxu0 0.0
      %593 = vmatprep.subr.mxu0 0.0
      %594 = vmatpush1.msra.mxu0 0.0
      %595 = vmatprep.subr.mxu0 0.0
      %596 = vmatpush1.msra.mxu0 0.0
      %597 = vmatprep.subr.mxu0 0.0
      %598 = vmatpush1.msra.mxu0 0.0
      %599 = vmatprep.subr.mxu0 0.0
      %600 = vmatpush1.msra.mxu0 0.0
      %601 = vmatprep.subr.mxu0 0.0
      %602 = vmatpush1.msra.mxu0 0.0
      %603 = vmatprep.subr.mxu0 0.0
      %604 = vmatpush1.msra.mxu0 0.0
      %605 = vmatprep.mubr.f32.mxu0 0.0
      %v606 = vand.u32 %v445, 4294901760
      %607 = vmatmul.mubr.f32.gmra.mrb[0].mxu0 %v606
      %v608 = vpop.f32.mrb[0].mxu0
      %v609 = vadd.f32 %v523, %v608
      %v610 = vpop.f32.mrb[0].mxu0
      %611 = vmatprep.mubr.f32.mxu0 0.0
      %v612 = vand.u32 %v448, 4294901760
      %613 = vmatmul.mubr.f32.gmra.mrb[0].mxu0 %v612
      %v614 = vpop.f32.mrb[0].mxu0
      %v615 = vadd.f32 %v533, %v614
      %v616 = vpop.f32.mrb[0].mxu0
      %617 = vdwg.mxu0
      %618 = vmatprep.subr.mxu0 0.0
      %v619 = vand.u32 %v252, 4294901760
      %v620 = vsub.f32 %v252, %v619
      %621 = vmatpush1.msra.mxu0 %v620
      %622 = vmatprep.subr.mxu0 0.0
      %623 = vmatpush1.msra.mxu0 0.0
      %624 = vmatprep.subr.mxu0 0.0
      %625 = vmatpush1.msra.mxu0 0.0
      %626 = vmatprep.subr.mxu0 0.0
      %627 = vmatpush1.msra.mxu0 0.0
      %628 = vmatprep.subr.mxu0 0.0
      %629 = vmatpush1.msra.mxu0 0.0
      %630 = vmatprep.subr.mxu0 0.0
      %631 = vmatpush1.msra.mxu0 0.0
      %632 = vmatprep.subr.mxu0 0.0
      %633 = vmatpush1.msra.mxu0 0.0
      %634 = vmatprep.subr.mxu0 0.0
      %635 = vmatpush1.msra.mxu0 0.0
      %636 = vmatprep.subr.mxu0 0.0
      %637 = vmatpush1.msra.mxu0 0.0
      %638 = vmatprep.subr.mxu0 0.0
      %639 = vmatpush1.msra.mxu0 0.0
      %640 = vmatprep.subr.mxu0 0.0
      %641 = vmatpush1.msra.mxu0 0.0
      %642 = vmatprep.subr.mxu0 0.0
      %643 = vmatpush1.msra.mxu0 0.0
      %644 = vmatprep.subr.mxu0 0.0
      %645 = vmatpush1.msra.mxu0 0.0
      %646 = vmatprep.subr.mxu0 0.0
      %647 = vmatpush1.msra.mxu0 0.0
      %648 = vmatprep.subr.mxu0 0.0
      %649 = vmatpush1.msra.mxu0 0.0
      %650 = vmatprep.subr.mxu0 0.0
      %651 = vmatpush1.msra.mxu0 0.0
      %652 = vmatprep.subr.mxu0 0.0
      %653 = vmatpush1.msra.mxu0 0.0
      %654 = vmatprep.subr.mxu0 0.0
      %655 = vmatpush1.msra.mxu0 0.0
      %656 = vmatprep.subr.mxu0 0.0
      %657 = vmatpush1.msra.mxu0 0.0
      %658 = vmatprep.subr.mxu0 0.0
      %659 = vmatpush1.msra.mxu0 0.0
      %660 = vmatprep.subr.mxu0 0.0
      %661 = vmatpush1.msra.mxu0 0.0
      %662 = vmatprep.subr.mxu0 0.0
      %663 = vmatpush1.msra.mxu0 0.0
      %664 = vmatprep.subr.mxu0 0.0
      %665 = vmatpush1.msra.mxu0 0.0
      %666 = vmatprep.subr.mxu0 0.0
      %667 = vmatpush1.msra.mxu0 0.0
      %668 = vmatprep.subr.mxu0 0.0
      %669 = vmatpush1.msra.mxu0 0.0
      %670 = vmatprep.subr.mxu0 0.0
      %671 = vmatpush1.msra.mxu0 0.0
      %672 = vmatprep.subr.mxu0 0.0
      %673 = vmatpush1.msra.mxu0 0.0
      %674 = vmatprep.subr.mxu0 0.0
      %675 = vmatpush1.msra.mxu0 0.0
      %676 = vmatprep.subr.mxu0 0.0
      %677 = vmatpush1.msra.mxu0 0.0
      %678 = vmatprep.subr.mxu0 0.0
      %679 = vmatpush1.msra.mxu0 0.0
      %680 = vmatprep.subr.mxu0 0.0
      %681 = vmatpush1.msra.mxu0 0.0
      %682 = vmatprep.subr.mxu0 0.0
      %683 = vmatpush1.msra.mxu0 0.0
      %684 = vmatprep.mubr.f32.mxu0 0.0
      %v685 = vand.u32 %v445, 4294901760
      %v686 = vsub.f32 %v445, %v685
      %687 = vmatmul.mubr.f32.gmra.mrb[0].mxu0 %v686
      %v688 = vpop.f32.mrb[0].mxu0
      %v689 = vadd.f32 %v609, %v688
      %v690 = vpop.f32.mrb[0].mxu0
      %691 = vmatprep.mubr.f32.mxu0 0.0
      %v692 = vand.u32 %v448, 4294901760
      %v693 = vsub.f32 %v448, %v692
      %694 = vmatmul.mubr.f32.gmra.mrb[0].mxu0 %v693
      %v695 = vpop.f32.mrb[0].mxu0
      %v696 = vadd.f32 %v615, %v695
      %v697 = vpop.f32.mrb[0].mxu0
      %698 = vdwg.mxu0
      %699 = vmatprep.subr.mxu0 0.0
      %v700 = vand.u32 %v252, 4294901760
      %701 = vmatpush1.msra.mxu0 %v700
      %702 = vmatprep.subr.mxu0 0.0
      %703 = vmatpush1.msra.mxu0 0.0
      %704 = vmatprep.subr.mxu0 0.0
      %705 = vmatpush1.msra.mxu0 0.0
      %706 = vmatprep.subr.mxu0 0.0
      %707 = vmatpush1.msra.mxu0 0.0
      %708 = vmatprep.subr.mxu0 0.0
      %709 = vmatpush1.msra.mxu0 0.0
      %710 = vmatprep.subr.mxu0 0.0
      %711 = vmatpush1.msra.mxu0 0.0
      %712 = vmatprep.subr.mxu0 0.0
      %713 = vmatpush1.msra.mxu0 0.0
      %714 = vmatprep.subr.mxu0 0.0
      %715 = vmatpush1.msra.mxu0 0.0
      %716 = vmatprep.subr.mxu0 0.0
      %717 = vmatpush1.msra.mxu0 0.0
      %718 = vmatprep.subr.mxu0 0.0
      %719 = vmatpush1.msra.mxu0 0.0
      %720 = vmatprep.subr.mxu0 0.0
      %721 = vmatpush1.msra.mxu0 0.0
      %722 = vmatprep.subr.mxu0 0.0
      %723 = vmatpush1.msra.mxu0 0.0
      %724 = vmatprep.subr.mxu0 0.0
      %725 = vmatpush1.msra.mxu0 0.0
      %726 = vmatprep.subr.mxu0 0.0
      %727 = vmatpush1.msra.mxu0 0.0
      %728 = vmatprep.subr.mxu0 0.0
      %729 = vmatpush1.msra.mxu0 0.0
      %730 = vmatprep.subr.mxu0 0.0
      %731 = vmatpush1.msra.mxu0 0.0
      %732 = vmatprep.subr.mxu0 0.0
      %733 = vmatpush1.msra.mxu0 0.0
      %734 = vmatprep.subr.mxu0 0.0
      %735 = vmatpush1.msra.mxu0 0.0
      %736 = vmatprep.subr.mxu0 0.0
      %737 = vmatpush1.msra.mxu0 0.0
      %738 = vmatprep.subr.mxu0 0.0
      %739 = vmatpush1.msra.mxu0 0.0
      %740 = vmatprep.subr.mxu0 0.0
      %741 = vmatpush1.msra.mxu0 0.0
      %742 = vmatprep.subr.mxu0 0.0
      %743 = vmatpush1.msra.mxu0 0.0
      %744 = vmatprep.subr.mxu0 0.0
      %745 = vmatpush1.msra.mxu0 0.0
      %746 = vmatprep.subr.mxu0 0.0
      %747 = vmatpush1.msra.mxu0 0.0
      %748 = vmatprep.subr.mxu0 0.0
      %749 = vmatpush1.msra.mxu0 0.0
      %750 = vmatprep.subr.mxu0 0.0
      %751 = vmatpush1.msra.mxu0 0.0
      %752 = vmatprep.subr.mxu0 0.0
      %753 = vmatpush1.msra.mxu0 0.0
      %754 = vmatprep.subr.mxu0 0.0
      %755 = vmatpush1.msra.mxu0 0.0
      %756 = vmatprep.subr.mxu0 0.0
      %757 = vmatpush1.msra.mxu0 0.0
      %758 = vmatprep.subr.mxu0 0.0
      %759 = vmatpush1.msra.mxu0 0.0
      %760 = vmatprep.subr.mxu0 0.0
      %761 = vmatpush1.msra.mxu0 0.0
      %762 = vmatprep.subr.mxu0 0.0
      %763 = vmatpush1.msra.mxu0 0.0
      %764 = vmatprep.mubr.f32.mxu0 0.0
      %v765 = vand.u32 %v445, 4294901760
      %v766 = vsub.f32 %v445, %v765
      %v767 = vand.u32 %v766, 4294901760
      %768 = vmatmul.mubr.f32.gmra.mrb[0].mxu0 %v767
      %v769 = vpop.f32.mrb[0].mxu0
      %v770 = vadd.f32 %v689, %v769
      %v771 = vpop.f32.mrb[0].mxu0
      %772 = vmatprep.mubr.f32.mxu0 0.0
      %v773 = vand.u32 %v448, 4294901760
      %v774 = vsub.f32 %v448, %v773
      %v775 = vand.u32 %v774, 4294901760
      %776 = vmatmul.mubr.f32.gmra.mrb[0].mxu0 %v775
      %v777 = vpop.f32.mrb[0].mxu0
      %v778 = vadd.f32 %v696, %v777
      %v779 = vpop.f32.mrb[0].mxu0
      %780 = vdwg.mxu0
      %781 = vmatprep.subr.mxu0 0.0
      %v782 = vand.u32 %v252, 4294901760
      %v783 = vsub.f32 %v252, %v782
      %v784 = vand.u32 %v783, 4294901760
      %785 = vmatpush1.msra.mxu0 %v784
      %786 = vmatprep.subr.mxu0 0.0
      %787 = vmatpush1.msra.mxu0 0.0
      %788 = vmatprep.subr.mxu0 0.0
      %789 = vmatpush1.msra.mxu0 0.0
      %790 = vmatprep.subr.mxu0 0.0
      %791 = vmatpush1.msra.mxu0 0.0
      %792 = vmatprep.subr.mxu0 0.0
      %793 = vmatpush1.msra.mxu0 0.0
      %794 = vmatprep.subr.mxu0 0.0
      %795 = vmatpush1.msra.mxu0 0.0
      %796 = vmatprep.subr.mxu0 0.0
      %797 = vmatpush1.msra.mxu0 0.0
      %798 = vmatprep.subr.mxu0 0.0
      %799 = vmatpush1.msra.mxu0 0.0
      %800 = vmatprep.subr.mxu0 0.0
      %801 = vmatpush1.msra.mxu0 0.0
      %802 = vmatprep.subr.mxu0 0.0
      %803 = vmatpush1.msra.mxu0 0.0
      %804 = vmatprep.subr.mxu0 0.0
      %805 = vmatpush1.msra.mxu0 0.0
      %806 = vmatprep.subr.mxu0 0.0
      %807 = vmatpush1.msra.mxu0 0.0
      %808 = vmatprep.subr.mxu0 0.0
      %809 = vmatpush1.msra.mxu0 0.0
      %810 = vmatprep.subr.mxu0 0.0
      %811 = vmatpush1.msra.mxu0 0.0
      %812 = vmatprep.subr.mxu0 0.0
      %813 = vmatpush1.msra.mxu0 0.0
      %814 = vmatprep.subr.mxu0 0.0
      %815 = vmatpush1.msra.mxu0 0.0
      %816 = vmatprep.subr.mxu0 0.0
      %817 = vmatpush1.msra.mxu0 0.0
      %818 = vmatprep.subr.mxu0 0.0
      %819 = vmatpush1.msra.mxu0 0.0
      %820 = vmatprep.subr.mxu0 0.0
      %821 = vmatpush1.msra.mxu0 0.0
      %822 = vmatprep.subr.mxu0 0.0
      %823 = vmatpush1.msra.mxu0 0.0
      %824 = vmatprep.subr.mxu0 0.0
      %825 = vmatpush1.msra.mxu0 0.0
      %826 = vmatprep.subr.mxu0 0.0
      %827 = vmatpush1.msra.mxu0 0.0
      %828 = vmatprep.subr.mxu0 0.0
      %829 = vmatpush1.msra.mxu0 0.0
      %830 = vmatprep.subr.mxu0 0.0
      %831 = vmatpush1.msra.mxu0 0.0
      %832 = vmatprep.subr.mxu0 0.0
      %833 = vmatpush1.msra.mxu0 0.0
      %834 = vmatprep.subr.mxu0 0.0
      %835 = vmatpush1.msra.mxu0 0.0
      %836 = vmatprep.subr.mxu0 0.0
      %837 = vmatpush1.msra.mxu0 0.0
      %838 = vmatprep.subr.mxu0 0.0
      %839 = vmatpush1.msra.mxu0 0.0
      %840 = vmatprep.subr.mxu0 0.0
      %841 = vmatpush1.msra.mxu0 0.0
      %842 = vmatprep.subr.mxu0 0.0
      %843 = vmatpush1.msra.mxu0 0.0
      %844 = vmatprep.subr.mxu0 0.0
      %845 = vmatpush1.msra.mxu0 0.0
      %846 = vmatprep.subr.mxu0 0.0
      %847 = vmatpush1.msra.mxu0 0.0
      %848 = vmatprep.mubr.f32.mxu0 0.0
      %v849 = vand.u32 %v445, 4294901760
      %850 = vmatmul.mubr.f32.gmra.mrb[0].mxu0 %v849
      %v851 = vpop.f32.mrb[0].mxu0
      %v852 = vadd.f32 %v770, %v851
      %v853 = vpop.f32.mrb[0].mxu0
      %854 = vmatprep.mubr.f32.mxu0 0.0
      %v855 = vand.u32 %v448, 4294901760
      %856 = vmatmul.mubr.f32.gmra.mrb[0].mxu0 %v855
      %v857 = vpop.f32.mrb[0].mxu0
      %v858 = vadd.f32 %v778, %v857
      %v859 = vpop.f32.mrb[0].mxu0
      %860 = vdwg.mxu0
      %861 = vmatprep.subr.mxu0 0.0
      %v862 = vand.u32 %v252, 4294901760
      %863 = vmatpush1.msra.mxu0 %v862
      %864 = vmatprep.subr.mxu0 0.0
      %865 = vmatpush1.msra.mxu0 0.0
      %866 = vmatprep.subr.mxu0 0.0
      %867 = vmatpush1.msra.mxu0 0.0
      %868 = vmatprep.subr.mxu0 0.0
      %869 = vmatpush1.msra.mxu0 0.0
      %870 = vmatprep.subr.mxu0 0.0
      %871 = vmatpush1.msra.mxu0 0.0
      %872 = vmatprep.subr.mxu0 0.0
      %873 = vmatpush1.msra.mxu0 0.0
      %874 = vmatprep.subr.mxu0 0.0
      %875 = vmatpush1.msra.mxu0 0.0
      %876 = vmatprep.subr.mxu0 0.0
      %877 = vmatpush1.msra.mxu0 0.0
      %878 = vmatprep.subr.mxu0 0.0
      %879 = vmatpush1.msra.mxu0 0.0
      %880 = vmatprep.subr.mxu0 0.0
      %881 = vmatpush1.msra.mxu0 0.0
      %882 = vmatprep.subr.mxu0 0.0
      %883 = vmatpush1.msra.mxu0 0.0
      %884 = vmatprep.subr.mxu0 0.0
      %885 = vmatpush1.msra.mxu0 0.0
      %886 = vmatprep.subr.mxu0 0.0
      %887 = vmatpush1.msra.mxu0 0.0
      %888 = vmatprep.subr.mxu0 0.0
      %889 = vmatpush1.msra.mxu0 0.0
      %890 = vmatprep.subr.mxu0 0.0
      %891 = vmatpush1.msra.mxu0 0.0
      %892 = vmatprep.subr.mxu0 0.0
      %893 = vmatpush1.msra.mxu0 0.0
      %894 = vmatprep.subr.mxu0 0.0
      %895 = vmatpush1.msra.mxu0 0.0
      %896 = vmatprep.subr.mxu0 0.0
      %897 = vmatpush1.msra.mxu0 0.0
      %898 = vmatprep.subr.mxu0 0.0
      %899 = vmatpush1.msra.mxu0 0.0
      %900 = vmatprep.subr.mxu0 0.0
      %901 = vmatpush1.msra.mxu0 0.0
      %902 = vmatprep.subr.mxu0 0.0
      %903 = vmatpush1.msra.mxu0 0.0
      %904 = vmatprep.subr.mxu0 0.0
      %905 = vmatpush1.msra.mxu0 0.0
      %906 = vmatprep.subr.mxu0 0.0
      %907 = vmatpush1.msra.mxu0 0.0
      %908 = vmatprep.subr.mxu0 0.0
      %909 = vmatpush1.msra.mxu0 0.0
      %910 = vmatprep.subr.mxu0 0.0
      %911 = vmatpush1.msra.mxu0 0.0
      %912 = vmatprep.subr.mxu0 0.0
      %913 = vmatpush1.msra.mxu0 0.0
      %914 = vmatprep.subr.mxu0 0.0
      %915 = vmatpush1.msra.mxu0 0.0
      %916 = vmatprep.subr.mxu0 0.0
      %917 = vmatpush1.msra.mxu0 0.0
      %918 = vmatprep.subr.mxu0 0.0
      %919 = vmatpush1.msra.mxu0 0.0
      %920 = vmatprep.subr.mxu0 0.0
      %921 = vmatpush1.msra.mxu0 0.0
      %922 = vmatprep.subr.mxu0 0.0
      %923 = vmatpush1.msra.mxu0 0.0
      %924 = vmatprep.subr.mxu0 0.0
      %925 = vmatpush1.msra.mxu0 0.0
      %926 = vmatprep.mubr.f32.mxu0 0.0
      %v927 = vand.u32 %v445, 4294901760
      %928 = vmatmul.mubr.f32.gmra.mrb[0].mxu0 %v927
      %v929 = vpop.f32.mrb[0].mxu0
      %v930 = vadd.f32 %v852, %v929
      %v931 = vpop.f32.mrb[0].mxu0
      %932 = vmatprep.mubr.f32.mxu0 0.0
      %v933 = vand.u32 %v448, 4294901760
      %934 = vmatmul.mubr.f32.gmra.mrb[0].mxu0 %v933
      %v935 = vpop.f32.mrb[0].mxu0
      %v936 = vadd.f32 %v858, %v935
      %v937 = vpop.f32.mrb[0].mxu0
      %938 = vdwg.mxu0
      %v941 = vcombine.high %v930, %v930
      %v943 = vunpack.c.l.s4 1966171168
      %v944 = vunpack.c.0.s8 %v943
      %v945 = vlaneseq
      %v946 = vshrl.u32 %v945, 7
      %v947 = vsub.s32 %v944, %v946
      %v948 = vrot.slane %v930, %v947
      %v950 = vunpack.c.l.s4 1966171168
      %v951 = vunpack.c.0.s8 %v950
      %v952 = vlaneseq
      %v953 = vshrl.u32 %v952, 7
      %v954 = vsub.s32 %v951, %v953
      %v955 = vrot.slane %v941, %v954
      %v956 = vcombine.high %v948, %v948
      %v957 = vcombine.high %v955, %v955
      %v959 = vunpack.c.l.s4 1966171168
      %v960 = vunpack.c.0.s8 %v959
      %v961 = vlaneseq
      %v962 = vshrl.u32 %v961, 7
      %v963 = vsub.s32 %v960, %v962
      %v964 = vrot.slane %v948, %v963
      %v966 = vunpack.c.l.s4 1966171168
      %v967 = vunpack.c.0.s8 %v966
      %v968 = vlaneseq
      %v969 = vshrl.u32 %v968, 7
      %v970 = vsub.s32 %v967, %v969
      %v971 = vrot.slane %v955, %v970
      %v973 = vunpack.c.l.s4 1966171168
      %v974 = vunpack.c.0.s8 %v973
      %v975 = vlaneseq
      %v976 = vshrl.u32 %v975, 7
      %v977 = vsub.s32 %v974, %v976
      %v978 = vrot.slane %v956, %v977
      %v980 = vunpack.c.l.s4 1966171168
      %v981 = vunpack.c.0.s8 %v980
      %v982 = vlaneseq
      %v983 = vshrl.u32 %v982, 7
      %v984 = vsub.s32 %v981, %v983
      %v985 = vrot.slane %v957, %v984
      %v986 = vcombine.high %v964, %v964
      %v987 = vcombine.high %v971, %v971
      %v988 = vcombine.high %v978, %v978
      %v989 = vcombine.high %v985, %v985
      %v991 = vunpack.c.l.s4 1966171168
      %v992 = vunpack.c.0.s8 %v991
      %v993 = vlaneseq
      %v994 = vshrl.u32 %v993, 7
      %v995 = vsub.s32 %v992, %v994
      %v996 = vrot.slane %v936, %v995
      %v997 = vcombine.high %v996, %v996
      %v999 = vunpack.c.l.s4 1966171168
      %v1000 = vunpack.c.0.s8 %v999
      %v1001 = vlaneseq
      %v1002 = vshrl.u32 %v1001, 7
      %v1003 = vsub.s32 %v1000, %v1002
      %v1004 = vrot.slane %v996, %v1003
      %v1006 = vunpack.c.l.s4 1966171168
      %v1007 = vunpack.c.0.s8 %v1006
      %v1008 = vlaneseq
      %v1009 = vshrl.u32 %v1008, 7
      %v1010 = vsub.s32 %v1007, %v1009
      %v1011 = vrot.slane %v997, %v1010
      %v1012 = vcombine.high %v1004, %v1004
      %v1013 = vcombine.high %v1011, %v1011
      %v1014 = vlaneseq
      %v1015 = vshrl.u32 %v1014, 7
      %v1016 = vsub.s32 0, %v1015
      %v1017 = vrot.slane %v964, %v1016
      %v1018 = vlaneseq
      %v1019 = vshrl.u32 %v1018, 7
      %v1020 = vsub.s32 0, %v1019
      %v1021 = vrot.slane %v978, %v1020
      %v1022 = vlaneseq
      %v1023 = vshrl.u32 %v1022, 7
      %v1024 = vsub.s32 0, %v1023
      %v1025 = vrot.slane %v986, %v1024
      %v1026 = vlaneseq
      %v1027 = vshrl.u32 %v1026, 7
      %v1028 = vsub.s32 0, %v1027
      %v1029 = vrot.slane %v988, %v1028
      %v1030 = vlaneseq
      %v1031 = vshrl.u32 %v1030, 7
      %v1032 = vsub.s32 0, %v1031
      %v1033 = vrot.slane %v971, %v1032
      %v1034 = vlaneseq
      %v1035 = vshrl.u32 %v1034, 7
      %v1036 = vsub.s32 0, %v1035
      %v1037 = vrot.slane %v985, %v1036
      %v1038 = vlaneseq
      %v1039 = vshrl.u32 %v1038, 7
      %v1040 = vsub.s32 0, %v1039
      %v1041 = vrot.slane %v987, %v1040
      %v1042 = vlaneseq
      %v1043 = vshrl.u32 %v1042, 7
      %v1044 = vsub.s32 0, %v1043
      %v1045 = vrot.slane %v989, %v1044
      %v1046 = vlaneseq
      %v1047 = vshrl.u32 %v1046, 7
      %v1048 = vsub.s32 0, %v1047
      %v1049 = vrot.slane %v1004, %v1048
      %v1050 = vlaneseq
      %v1051 = vshrl.u32 %v1050, 7
      %v1052 = vsub.s32 0, %v1051
      %v1053 = vrot.slane %v1011, %v1052
      %v1054 = vlaneseq
      %v1055 = vshrl.u32 %v1054, 7
      %v1056 = vsub.s32 0, %v1055
      %v1057 = vrot.slane %v1012, %v1056
      %v1058 = vlaneseq
      %v1059 = vshrl.u32 %v1058, 7
      %v1060 = vsub.s32 0, %v1059
      %v1061 = vrot.slane %v1013, %v1060
      %v1074 = vmul.f32 %v1017, %v253
      %v1075 = vmul.f32 %v1021, %v253
      %v1076 = vmul.f32 %v1025, %v253
      %v1077 = vmul.f32 %v1029, %v253
      %v1078 = vmul.f32 %v1033, %v253
      %v1079 = vmul.f32 %v1037, %v253
      %v1080 = vmul.f32 %v1041, %v253
      %v1081 = vmul.f32 %v1045, %v253
      %v1082 = vmul.f32 %v1049, %v253
      %v1083 = vmul.f32 %v1053, %v253
      %v1084 = vmul.f32 %v1057, %v253
      %v1085 = vmul.f32 %v1061, %v253
      %v1086 = vcombine.high %v249, %v249
      %v1088 = vunpack.c.l.s4 1966171168
      %v1089 = vunpack.c.0.s8 %v1088
      %v1090 = vlaneseq
      %v1091 = vshrl.u32 %v1090, 7
      %v1092 = vsub.s32 %v1089, %v1091
      %v1093 = vrot.slane %v249, %v1092
      %v1095 = vunpack.c.l.s4 1966171168
      %v1096 = vunpack.c.0.s8 %v1095
      %v1097 = vlaneseq
      %v1098 = vshrl.u32 %v1097, 7
      %v1099 = vsub.s32 %v1096, %v1098
      %v1100 = vrot.slane %v1086, %v1099
      %v1101 = vcombine.high %v1093, %v1093
      %v1102 = vcombine.high %v1100, %v1100
      %v1104 = vunpack.c.l.s4 1966171168
      %v1105 = vunpack.c.0.s8 %v1104
      %v1106 = vlaneseq
      %v1107 = vshrl.u32 %v1106, 7
      %v1108 = vsub.s32 %v1105, %v1107
      %v1109 = vrot.slane %v1093, %v1108
      %v1111 = vunpack.c.l.s4 1966171168
      %v1112 = vunpack.c.0.s8 %v1111
      %v1113 = vlaneseq
      %v1114 = vshrl.u32 %v1113, 7
      %v1115 = vsub.s32 %v1112, %v1114
      %v1116 = vrot.slane %v1100, %v1115
      %v1118 = vunpack.c.l.s4 1966171168
      %v1119 = vunpack.c.0.s8 %v1118
      %v1120 = vlaneseq
      %v1121 = vshrl.u32 %v1120, 7
      %v1122 = vsub.s32 %v1119, %v1121
      %v1123 = vrot.slane %v1101, %v1122
      %v1125 = vunpack.c.l.s4 1966171168
      %v1126 = vunpack.c.0.s8 %v1125
      %v1127 = vlaneseq
      %v1128 = vshrl.u32 %v1127, 7
      %v1129 = vsub.s32 %v1126, %v1128
      %v1130 = vrot.slane %v1102, %v1129
      %v1131 = vcombine.high %v1109, %v1109
      %v1132 = vcombine.high %v1116, %v1116
      %v1133 = vcombine.high %v1123, %v1123
      %v1134 = vcombine.high %v1130, %v1130
      %v1136 = vunpack.c.l.s4 1966171168
      %v1137 = vunpack.c.0.s8 %v1136
      %v1138 = vlaneseq
      %v1139 = vshrl.u32 %v1138, 7
      %v1140 = vsub.s32 %v1137, %v1139
      %v1141 = vrot.slane %v251, %v1140
      %v1142 = vcombine.high %v1141, %v1141
      %v1144 = vunpack.c.l.s4 1966171168
      %v1145 = vunpack.c.0.s8 %v1144
      %v1146 = vlaneseq
      %v1147 = vshrl.u32 %v1146, 7
      %v1148 = vsub.s32 %v1145, %v1147
      %v1149 = vrot.slane %v1141, %v1148
      %v1151 = vunpack.c.l.s4 1966171168
      %v1152 = vunpack.c.0.s8 %v1151
      %v1153 = vlaneseq
      %v1154 = vshrl.u32 %v1153, 7
      %v1155 = vsub.s32 %v1152, %v1154
      %v1156 = vrot.slane %v1142, %v1155
      %v1157 = vcombine.high %v1149, %v1149
      %v1158 = vcombine.high %v1156, %v1156
      %v1159 = vpack.c.bf16 %v1075, %v1074
      %v1160 = vpack.c.bf16 %v1077, %v1076
      %v1161 = vpack.c.bf16 %v1079, %v1078
      %v1162 = vunpack.c.l.bf16 %v1159
      %v1163 = vunpack.c.h.bf16 %v1159
      %v1164 = vunpack.c.l.bf16 %v1160
      %v1165 = vunpack.c.h.bf16 %v1160
      %v1166 = vunpack.c.l.bf16 %v1161
      %v1167 = vunpack.c.h.bf16 %v1161
      %v1168 = vsub.f32 %v1074, %v1162
      %v1169 = vsub.f32 %v1075, %v1163
      %v1170 = vsub.f32 %v1076, %v1164
      %v1171 = vsub.f32 %v1077, %v1165
      %v1172 = vsub.f32 %v1078, %v1166
      %v1173 = vsub.f32 %v1079, %v1167
      %v1174 = vpack.c.bf16 %v1169, %v1168
      %v1175 = vpack.c.bf16 %v1171, %v1170
      %v1176 = vpack.c.bf16 %v1173, %v1172
      %vm1177 = vcmask 523264
      %v1179 = vsel %vm1177, %v1174, 0
      %v1182 = vsel %vm1177, %v1175, 0
      %v1185 = vsel %vm1177, %v1176, 0
      %1187 = vmatprep.subr.bf16.mxu0 %v436
      %1188 = vmatpush1.bf16.msra.mxu0 %v435
      %1189 = vmatprep.subr.bf16.mxu0 %v438
      %1190 = vmatpush1.bf16.msra.mxu0 %v437
      %1191 = vmatprep.subr.bf16.mxu0 %v440
      %1192 = vmatpush1.bf16.msra.mxu0 %v439
      %1193 = vmatprep.subr.bf16.mxu0 %v442
      %1194 = vmatpush1.bf16.msra.mxu0 %v441
      %1195 = vmatprep.subr.bf16.mxu0 0
      %1196 = vmatpush1.bf16.msra.mxu0 0
      %1197 = vmatprep.subr.bf16.mxu0 0
      %1198 = vmatpush1.bf16.msra.mxu0 0
      %1199 = vmatprep.subr.bf16.mxu0 0
      %1200 = vmatpush1.bf16.msra.mxu0 0
      %1201 = vmatprep.subr.bf16.mxu0 0
      %1202 = vmatpush1.bf16.msra.mxu0 0
      %1203 = vmatprep.subr.bf16.mxu0 0
      %1204 = vmatpush1.bf16.msra.mxu0 0
      %1205 = vmatprep.subr.bf16.mxu0 0
      %1206 = vmatpush1.bf16.msra.mxu0 0
      %1207 = vmatprep.subr.bf16.mxu0 0
      %1208 = vmatpush1.bf16.msra.mxu0 0
      %1209 = vmatprep.subr.bf16.mxu0 0
      %1210 = vmatpush1.bf16.msra.mxu0 0
      %1211 = vmatprep.subr.bf16.mxu0 0
      %1212 = vmatpush1.bf16.msra.mxu0 0
      %1213 = vmatprep.subr.bf16.mxu0 0
      %1214 = vmatpush1.bf16.msra.mxu0 0
      %1215 = vmatprep.subr.bf16.mxu0 0
      %1216 = vmatpush1.bf16.msra.mxu0 0
      %1217 = vmatprep.subr.bf16.mxu0 0
      %1218 = vmatpush1.bf16.msra.mxu0 0
      %1219 = vmatprep.mubr.bf16.mxu0 0
      %1220 = vmatmul.mubr.bf16.gmra.mrb[0].mxu0 %v1179
      %v1221 = vpop.f32.mrb[0].mxu0
      %v1222 = vadd.f32 0.0, %v1221
      %v1223 = vpop.f32.mrb[0].mxu0
      %v1224 = vadd.f32 0.0, %v1223
      %v1225 = vpop.f32.mrb[0].mxu0
      %v1226 = vadd.f32 0.0, %v1225
      %v1227 = vpop.f32.mrb[0].mxu0
      %v1228 = vadd.f32 0.0, %v1227
      %1229 = vmatprep.mubr.bf16.mxu0 0
      %1230 = vmatmul.mubr.bf16.gmra.mrb[0].mxu0 %v1182
      %v1231 = vpop.f32.mrb[0].mxu0
      %v1232 = vadd.f32 0.0, %v1231
      %v1233 = vpop.f32.mrb[0].mxu0
      %v1234 = vadd.f32 0.0, %v1233
      %v1235 = vpop.f32.mrb[0].mxu0
      %v1236 = vadd.f32 0.0, %v1235
      %v1237 = vpop.f32.mrb[0].mxu0
      %v1238 = vadd.f32 0.0, %v1237
      %1239 = vmatprep.mubr.bf16.mxu0 0
      %1240 = vmatmul.mubr.bf16.gmra.mrb[0].mxu0 %v1185
      %v1241 = vpop.f32.mrb[0].mxu0
      %v1242 = vadd.f32 0.0, %v1241
      %v1243 = vpop.f32.mrb[0].mxu0
      %v1244 = vadd.f32 0.0, %v1243
      %v1245 = vpop.f32.mrb[0].mxu0
      %v1246 = vadd.f32 0.0, %v1245
      %v1247 = vpop.f32.mrb[0].mxu0
      %v1248 = vadd.f32 0.0, %v1247
      %1249 = vdwg.mxu0
      %v1251 = vsel %vm1177, %v1159, 0
      %v1254 = vsel %vm1177, %v1160, 0
      %v1257 = vsel %vm1177, %v1161, 0
      %1259 = vmatprep.subr.bf16.mxu0 %v436
      %1260 = vmatpush1.bf16.msra.mxu0 %v435
      %1261 = vmatprep.subr.bf16.mxu0 %v438
      %1262 = vmatpush1.bf16.msra.mxu0 %v437
      %1263 = vmatprep.subr.bf16.mxu0 %v440
      %1264 = vmatpush1.bf16.msra.mxu0 %v439
      %1265 = vmatprep.subr.bf16.mxu0 %v442
      %1266 = vmatpush1.bf16.msra.mxu0 %v441
      %1267 = vmatprep.subr.bf16.mxu0 0
      %1268 = vmatpush1.bf16.msra.mxu0 0
      %1269 = vmatprep.subr.bf16.mxu0 0
      %1270 = vmatpush1.bf16.msra.mxu0 0
      %1271 = vmatprep.subr.bf16.mxu0 0
      %1272 = vmatpush1.bf16.msra.mxu0 0
      %1273 = vmatprep.subr.bf16.mxu0 0
      %1274 = vmatpush1.bf16.msra.mxu0 0
      %1275 = vmatprep.subr.bf16.mxu0 0
      %1276 = vmatpush1.bf16.msra.mxu0 0
      %1277 = vmatprep.subr.bf16.mxu0 0
      %1278 = vmatpush1.bf16.msra.mxu0 0
      %1279 = vmatprep.subr.bf16.mxu0 0
      %1280 = vmatpush1.bf16.msra.mxu0 0
      %1281 = vmatprep.subr.bf16.mxu0 0
      %1282 = vmatpush1.bf16.msra.mxu0 0
      %1283 = vmatprep.subr.bf16.mxu0 0
      %1284 = vmatpush1.bf16.msra.mxu0 0
      %1285 = vmatprep.subr.bf16.mxu0 0
      %1286 = vmatpush1.bf16.msra.mxu0 0
      %1287 = vmatprep.subr.bf16.mxu0 0
      %1288 = vmatpush1.bf16.msra.mxu0 0
      %1289 = vmatprep.subr.bf16.mxu0 0
      %1290 = vmatpush1.bf16.msra.mxu0 0
      %1291 = vmatprep.mubr.bf16.mxu0 0
      %1292 = vmatmul.mubr.bf16.gmra.mrb[0].mxu0 %v1251
      %v1293 = vpop.f32.mrb[0].mxu0
      %v1294 = vadd.f32 %v1222, %v1293
      %v1295 = vpop.f32.mrb[0].mxu0
      %v1296 = vadd.f32 %v1224, %v1295
      %v1297 = vpop.f32.mrb[0].mxu0
      %v1298 = vadd.f32 %v1226, %v1297
      %v1299 = vpop.f32.mrb[0].mxu0
      %v1300 = vadd.f32 %v1228, %v1299
      %1301 = vmatprep.mubr.bf16.mxu0 0
      %1302 = vmatmul.mubr.bf16.gmra.mrb[0].mxu0 %v1254
      %v1303 = vpop.f32.mrb[0].mxu0
      %v1304 = vadd.f32 %v1232, %v1303
      %v1305 = vpop.f32.mrb[0].mxu0
      %v1306 = vadd.f32 %v1234, %v1305
      %v1307 = vpop.f32.mrb[0].mxu0
      %v1308 = vadd.f32 %v1236, %v1307
      %v1309 = vpop.f32.mrb[0].mxu0
      %v1310 = vadd.f32 %v1238, %v1309
      %1311 = vmatprep.mubr.bf16.mxu0 0
      %1312 = vmatmul.mubr.bf16.gmra.mrb[0].mxu0 %v1257
      %v1313 = vpop.f32.mrb[0].mxu0
      %v1314 = vadd.f32 %v1242, %v1313
      %v1315 = vpop.f32.mrb[0].mxu0
      %v1316 = vadd.f32 %v1244, %v1315
      %v1317 = vpop.f32.mrb[0].mxu0
      %v1318 = vadd.f32 %v1246, %v1317
      %v1319 = vpop.f32.mrb[0].mxu0
      %v1320 = vadd.f32 %v1248, %v1319
      %1321 = vdwg.mxu0
      %v1322 = vlaneseq
      %v1323 = vshrl.u32 %v1322, 7
      %v1324 = vsub.s32 0, %v1323
      %v1325 = vrot.slane %v1109, %v1324
      %v1326 = vlaneseq
      %v1327 = vshrl.u32 %v1326, 7
      %v1328 = vsub.s32 0, %v1327
      %v1329 = vrot.slane %v1123, %v1328
      %v1330 = vlaneseq
      %v1331 = vshrl.u32 %v1330, 7
      %v1332 = vsub.s32 0, %v1331
      %v1333 = vrot.slane %v1131, %v1332
      %v1334 = vlaneseq
      %v1335 = vshrl.u32 %v1334, 7
      %v1336 = vsub.s32 0, %v1335
      %v1337 = vrot.slane %v1133, %v1336
      %v1338 = vlaneseq
      %v1339 = vshrl.u32 %v1338, 7
      %v1340 = vsub.s32 0, %v1339
      %v1341 = vrot.slane %v1116, %v1340
      %v1342 = vlaneseq
      %v1343 = vshrl.u32 %v1342, 7
      %v1344 = vsub.s32 0, %v1343
      %v1345 = vrot.slane %v1130, %v1344
      %1346 = vset.pattern.permute.xlu0 8
      %1347 = vperm.xlu0 %1346, %v1325
      %v1348 = vpop.permute.xlu0 %1347
      %1350 = vset.pattern.permute.xlu0 8
      %1351 = vperm.xlu0 %1350, %v1329
      %v1352 = vpop.permute.xlu0 %1351
      %1354 = vset.pattern.permute.xlu0 8
      %1355 = vperm.xlu0 %1354, %v1333
      %v1356 = vpop.permute.xlu0 %1355
      %1358 = vset.pattern.permute.xlu0 8
      %1359 = vperm.xlu0 %1358, %v1337
      %v1360 = vpop.permute.xlu0 %1359
      %1362 = vset.pattern.permute.xlu0 8
      %1363 = vperm.xlu0 %1362, %v1341
      %v1364 = vpop.permute.xlu0 %1363
      %1366 = vset.pattern.permute.xlu0 8
      %1367 = vperm.xlu0 %1366, %v1345
      %v1368 = vpop.permute.xlu0 %1367
      %v1370 = vadd.f32 %v1294, %v1348
      %v1371 = vadd.f32 %v1298, %v1352
      %v1372 = vadd.f32 %v1304, %v1356
      %v1373 = vadd.f32 %v1308, %v1360
      %v1374 = vadd.f32 %v1314, %v1364
      %v1375 = vadd.f32 %v1318, %v1368
      %v1376 = vmul.f32 %v1370, %v1371
      %v1377 = vmul.f32 %v1296, %v1300
      %v1378 = vsub.f32 %v1376, %v1377
      %v1379 = vmul.f32 %v1370, %v1300
      %v1380 = vmul.f32 %v1296, %v1371
      %v1381 = vadd.f32 %v1379, %v1380
      %v1382 = vmul.f32 %v1372, %v1373
      %v1383 = vmul.f32 %v1306, %v1310
      %v1384 = vsub.f32 %v1382, %v1383
      %v1385 = vmul.f32 %v1372, %v1310
      %v1386 = vmul.f32 %v1306, %v1373
      %v1387 = vadd.f32 %v1385, %v1386
      %v1388 = vmul.f32 %v1374, %v1375
      %v1389 = vmul.f32 %v1316, %v1320
      %v1390 = vsub.f32 %v1388, %v1389
      %v1391 = vmul.f32 %v1374, %v1320
      %v1392 = vmul.f32 %v1316, %v1375
      %v1393 = vadd.f32 %v1391, %v1392
      %v1394 = vmul.f32 %v1378, %v1384
      %v1395 = vmul.f32 %v1381, %v1387
      %v1396 = vsub.f32 %v1394, %v1395
      %v1397 = vmul.f32 %v1378, %v1387
      %v1398 = vmul.f32 %v1381, %v1384
      %v1399 = vadd.f32 %v1397, %v1398
      %v1400 = vmul.f32 %v1396, %v1390
      %v1401 = vmul.f32 %v1399, %v1393
      %v1402 = vsub.f32 %v1400, %v1401
      %v1403 = vmul.f32 %v1396, %v1393
      %v1404 = vmul.f32 %v1399, %v1390
      %v1405 = vadd.f32 %v1403, %v1404
      %v1406 = vpack.c.bf16 %v1081, %v1080
      %v1407 = vpack.c.bf16 %v1083, %v1082
      %v1408 = vpack.c.bf16 %v1085, %v1084
      %v1409 = vunpack.c.l.bf16 %v1406
      %v1410 = vunpack.c.h.bf16 %v1406
      %v1411 = vunpack.c.l.bf16 %v1407
      %v1412 = vunpack.c.h.bf16 %v1407
      %v1413 = vunpack.c.l.bf16 %v1408
      %v1414 = vunpack.c.h.bf16 %v1408
      %v1415 = vsub.f32 %v1080, %v1409
      %v1416 = vsub.f32 %v1081, %v1410
      %v1417 = vsub.f32 %v1082, %v1411
      %v1418 = vsub.f32 %v1083, %v1412
      %v1419 = vsub.f32 %v1084, %v1413
      %v1420 = vsub.f32 %v1085, %v1414
      %v1421 = vpack.c.bf16 %v1416, %v1415
      %v1422 = vpack.c.bf16 %v1418, %v1417
      %v1423 = vpack.c.bf16 %v1420, %v1419
      %v1425 = vsel %vm1177, %v1421, 0
      %v1428 = vsel %vm1177, %v1422, 0
      %v1431 = vsel %vm1177, %v1423, 0
      %1433 = vmatprep.subr.bf16.mxu0 %v436
      %1434 = vmatpush1.bf16.msra.mxu0 %v435
      %1435 = vmatprep.subr.bf16.mxu0 %v438
      %1436 = vmatpush1.bf16.msra.mxu0 %v437
      %1437 = vmatprep.subr.bf16.mxu0 %v440
      %1438 = vmatpush1.bf16.msra.mxu0 %v439
      %1439 = vmatprep.subr.bf16.mxu0 %v442
      %1440 = vmatpush1.bf16.msra.mxu0 %v441
      %1441 = vmatprep.subr.bf16.mxu0 0
      %1442 = vmatpush1.bf16.msra.mxu0 0
      %1443 = vmatprep.subr.bf16.mxu0 0
      %1444 = vmatpush1.bf16.msra.mxu0 0
      %1445 = vmatprep.subr.bf16.mxu0 0
      %1446 = vmatpush1.bf16.msra.mxu0 0
      %1447 = vmatprep.subr.bf16.mxu0 0
      %1448 = vmatpush1.bf16.msra.mxu0 0
      %1449 = vmatprep.subr.bf16.mxu0 0
      %1450 = vmatpush1.bf16.msra.mxu0 0
      %1451 = vmatprep.subr.bf16.mxu0 0
      %1452 = vmatpush1.bf16.msra.mxu0 0
      %1453 = vmatprep.subr.bf16.mxu0 0
      %1454 = vmatpush1.bf16.msra.mxu0 0
      %1455 = vmatprep.subr.bf16.mxu0 0
      %1456 = vmatpush1.bf16.msra.mxu0 0
      %1457 = vmatprep.subr.bf16.mxu0 0
      %1458 = vmatpush1.bf16.msra.mxu0 0
      %1459 = vmatprep.subr.bf16.mxu0 0
      %1460 = vmatpush1.bf16.msra.mxu0 0
      %1461 = vmatprep.subr.bf16.mxu0 0
      %1462 = vmatpush1.bf16.msra.mxu0 0
      %1463 = vmatprep.subr.bf16.mxu0 0
      %1464 = vmatpush1.bf16.msra.mxu0 0
      %1465 = vmatprep.mubr.bf16.mxu0 0
      %1466 = vmatmul.mubr.bf16.gmra.mrb[0].mxu0 %v1425
      %v1467 = vpop.f32.mrb[0].mxu0
      %v1468 = vadd.f32 0.0, %v1467
      %v1469 = vpop.f32.mrb[0].mxu0
      %v1470 = vadd.f32 0.0, %v1469
      %v1471 = vpop.f32.mrb[0].mxu0
      %v1472 = vadd.f32 0.0, %v1471
      %v1473 = vpop.f32.mrb[0].mxu0
      %v1474 = vadd.f32 0.0, %v1473
      %1475 = vmatprep.mubr.bf16.mxu0 0
      %1476 = vmatmul.mubr.bf16.gmra.mrb[0].mxu0 %v1428
      %v1477 = vpop.f32.mrb[0].mxu0
      %v1478 = vadd.f32 0.0, %v1477
      %v1479 = vpop.f32.mrb[0].mxu0
      %v1480 = vadd.f32 0.0, %v1479
      %v1481 = vpop.f32.mrb[0].mxu0
      %v1482 = vadd.f32 0.0, %v1481
      %v1483 = vpop.f32.mrb[0].mxu0
      %v1484 = vadd.f32 0.0, %v1483
      %1485 = vmatprep.mubr.bf16.mxu0 0
      %1486 = vmatmul.mubr.bf16.gmra.mrb[0].mxu0 %v1431
      %v1487 = vpop.f32.mrb[0].mxu0
      %v1488 = vadd.f32 0.0, %v1487
      %v1489 = vpop.f32.mrb[0].mxu0
      %v1490 = vadd.f32 0.0, %v1489
      %v1491 = vpop.f32.mrb[0].mxu0
      %v1492 = vadd.f32 0.0, %v1491
      %v1493 = vpop.f32.mrb[0].mxu0
      %v1494 = vadd.f32 0.0, %v1493
      %1495 = vdwg.mxu0
      %v1497 = vsel %vm1177, %v1406, 0
      %v1500 = vsel %vm1177, %v1407, 0
      %v1503 = vsel %vm1177, %v1408, 0
      %1505 = vmatprep.subr.bf16.mxu0 %v436
      %1506 = vmatpush1.bf16.msra.mxu0 %v435
      %1507 = vmatprep.subr.bf16.mxu0 %v438
      %1508 = vmatpush1.bf16.msra.mxu0 %v437
      %1509 = vmatprep.subr.bf16.mxu0 %v440
      %1510 = vmatpush1.bf16.msra.mxu0 %v439
      %1511 = vmatprep.subr.bf16.mxu0 %v442
      %1512 = vmatpush1.bf16.msra.mxu0 %v441
      %1513 = vmatprep.subr.bf16.mxu0 0
      %1514 = vmatpush1.bf16.msra.mxu0 0
      %1515 = vmatprep.subr.bf16.mxu0 0
      %1516 = vmatpush1.bf16.msra.mxu0 0
      %1517 = vmatprep.subr.bf16.mxu0 0
      %1518 = vmatpush1.bf16.msra.mxu0 0
      %1519 = vmatprep.subr.bf16.mxu0 0
      %1520 = vmatpush1.bf16.msra.mxu0 0
      %1521 = vmatprep.subr.bf16.mxu0 0
      %1522 = vmatpush1.bf16.msra.mxu0 0
      %1523 = vmatprep.subr.bf16.mxu0 0
      %1524 = vmatpush1.bf16.msra.mxu0 0
      %1525 = vmatprep.subr.bf16.mxu0 0
      %1526 = vmatpush1.bf16.msra.mxu0 0
      %1527 = vmatprep.subr.bf16.mxu0 0
      %1528 = vmatpush1.bf16.msra.mxu0 0
      %1529 = vmatprep.subr.bf16.mxu0 0
      %1530 = vmatpush1.bf16.msra.mxu0 0
      %1531 = vmatprep.subr.bf16.mxu0 0
      %1532 = vmatpush1.bf16.msra.mxu0 0
      %1533 = vmatprep.subr.bf16.mxu0 0
      %1534 = vmatpush1.bf16.msra.mxu0 0
      %1535 = vmatprep.subr.bf16.mxu0 0
      %1536 = vmatpush1.bf16.msra.mxu0 0
      %1537 = vmatprep.mubr.bf16.mxu0 0
      %1538 = vmatmul.mubr.bf16.gmra.mrb[0].mxu0 %v1497
      %v1539 = vpop.f32.mrb[0].mxu0
      %v1540 = vadd.f32 %v1468, %v1539
      %v1541 = vpop.f32.mrb[0].mxu0
      %v1542 = vadd.f32 %v1470, %v1541
      %v1543 = vpop.f32.mrb[0].mxu0
      %v1544 = vadd.f32 %v1472, %v1543
      %v1545 = vpop.f32.mrb[0].mxu0
      %v1546 = vadd.f32 %v1474, %v1545
      %1547 = vmatprep.mubr.bf16.mxu0 0
      %1548 = vmatmul.mubr.bf16.gmra.mrb[0].mxu0 %v1500
      %v1549 = vpop.f32.mrb[0].mxu0
      %v1550 = vadd.f32 %v1478, %v1549
      %v1551 = vpop.f32.mrb[0].mxu0
      %v1552 = vadd.f32 %v1480, %v1551
      %v1553 = vpop.f32.mrb[0].mxu0
      %v1554 = vadd.f32 %v1482, %v1553
      %v1555 = vpop.f32.mrb[0].mxu0
      %v1556 = vadd.f32 %v1484, %v1555
      %1557 = vmatprep.mubr.bf16.mxu0 0
      %1558 = vmatmul.mubr.bf16.gmra.mrb[0].mxu0 %v1503
      %v1559 = vpop.f32.mrb[0].mxu0
      %v1560 = vadd.f32 %v1488, %v1559
      %v1561 = vpop.f32.mrb[0].mxu0
      %v1562 = vadd.f32 %v1490, %v1561
      %v1563 = vpop.f32.mrb[0].mxu0
      %v1564 = vadd.f32 %v1492, %v1563
      %v1565 = vpop.f32.mrb[0].mxu0
      %v1566 = vadd.f32 %v1494, %v1565
      %1567 = vdwg.mxu0
      %v1568 = vlaneseq
      %v1569 = vshrl.u32 %v1568, 7
      %v1570 = vsub.s32 0, %v1569
      %v1571 = vrot.slane %v1132, %v1570
      %v1572 = vlaneseq
      %v1573 = vshrl.u32 %v1572, 7
      %v1574 = vsub.s32 0, %v1573
      %v1575 = vrot.slane %v1134, %v1574
      %v1576 = vlaneseq
      %v1577 = vshrl.u32 %v1576, 7
      %v1578 = vsub.s32 0, %v1577
      %v1579 = vrot.slane %v1149, %v1578
      %v1580 = vlaneseq
      %v1581 = vshrl.u32 %v1580, 7
      %v1582 = vsub.s32 0, %v1581
      %v1583 = vrot.slane %v1156, %v1582
      %v1584 = vlaneseq
      %v1585 = vshrl.u32 %v1584, 7
      %v1586 = vsub.s32 0, %v1585
      %v1587 = vrot.slane %v1157, %v1586
      %v1588 = vlaneseq
      %v1589 = vshrl.u32 %v1588, 7
      %v1590 = vsub.s32 0, %v1589
      %v1591 = vrot.slane %v1158, %v1590
      %1592 = vset.pattern.permute.xlu0 8
      %1593 = vperm.xlu0 %1592, %v1571
      %v1594 = vpop.permute.xlu0 %1593
      %1596 = vset.pattern.permute.xlu0 8
      %1597 = vperm.xlu0 %1596, %v1575
      %v1598 = vpop.permute.xlu0 %1597
      %1600 = vset.pattern.permute.xlu0 8
      %1601 = vperm.xlu0 %1600, %v1579
      %v1602 = vpop.permute.xlu0 %1601
      %1604 = vset.pattern.permute.xlu0 8
      %1605 = vperm.xlu0 %1604, %v1583
      %v1606 = vpop.permute.xlu0 %1605
      %1608 = vset.pattern.permute.xlu0 8
      %1609 = vperm.xlu0 %1608, %v1587
      %v1610 = vpop.permute.xlu0 %1609
      %1612 = vset.pattern.permute.xlu0 8
      %1613 = vperm.xlu0 %1612, %v1591
      %v1614 = vpop.permute.xlu0 %1613
      %v1616 = vadd.f32 %v1540, %v1594
      %v1617 = vadd.f32 %v1544, %v1598
      %v1618 = vadd.f32 %v1550, %v1602
      %v1619 = vadd.f32 %v1554, %v1606
      %v1620 = vadd.f32 %v1560, %v1610
      %v1621 = vadd.f32 %v1564, %v1614
      %v1622 = vmul.f32 %v1616, %v1617
      %v1623 = vmul.f32 %v1542, %v1546
      %v1624 = vsub.f32 %v1622, %v1623
      %v1625 = vmul.f32 %v1616, %v1546
      %v1626 = vmul.f32 %v1542, %v1617
      %v1627 = vadd.f32 %v1625, %v1626
      %v1628 = vmul.f32 %v1618, %v1619
      %v1629 = vmul.f32 %v1552, %v1556
      %v1630 = vsub.f32 %v1628, %v1629
      %v1631 = vmul.f32 %v1618, %v1556
      %v1632 = vmul.f32 %v1552, %v1619
      %v1633 = vadd.f32 %v1631, %v1632
      %v1634 = vmul.f32 %v1620, %v1621
      %v1635 = vmul.f32 %v1562, %v1566
      %v1636 = vsub.f32 %v1634, %v1635
      %v1637 = vmul.f32 %v1620, %v1566
      %v1638 = vmul.f32 %v1562, %v1621
      %v1639 = vadd.f32 %v1637, %v1638
      %v1640 = vmul.f32 %v1624, %v1630
      %v1641 = vmul.f32 %v1627, %v1633
      %v1642 = vsub.f32 %v1640, %v1641
      %v1643 = vmul.f32 %v1624, %v1633
      %v1644 = vmul.f32 %v1627, %v1630
      %v1645 = vadd.f32 %v1643, %v1644
      %v1646 = vmul.f32 %v1642, %v1636
      %v1647 = vmul.f32 %v1645, %v1639
      %v1648 = vsub.f32 %v1646, %v1647
      %v1649 = vmul.f32 %v1642, %v1639
      %v1650 = vmul.f32 %v1645, %v1636
      %v1651 = vadd.f32 %v1649, %v1650
      %v1652 = vmul.f32 %v1402, %v1648
      %v1653 = vmul.f32 %v1405, %v1651
      %v1654 = vadd.f32 %v1652, %v1653
      %v1655 = vmul.f32 %v1405, %v1648
      %v1656 = vmul.f32 %v1402, %v1651
      %v1657 = vsub.f32 %v1655, %v1656
      %v1658 = vpack.c.bf16 %v1654, %v1654
      %v1659 = vpack.c.bf16 %v1657, %v1657
      %v1660 = vld [vmem:[%s4] sm:$0xf]
      %v1661 = vld [vmem:[%s4 + $0x4] sm:$0xf]
      %v1662 = vld [vmem:[%s4 + $0x8] sm:$0xf]
      %v1663 = vld [vmem:[%s4 + $0xc] sm:$0xf]
      %v1664 = vld [vmem:[%s4 + $0x10] sm:$0xf]
      %v1665 = vld [vmem:[%s4 + $0x14] sm:$0xf]
      %v1666 = vld [vmem:[%s4 + $0x18] sm:$0xf]
      %v1667 = vld [vmem:[%s4 + $0x1c] sm:$0xf]
      %v1668 = vld [vmem:[%s4 + $0x20] sm:$0xf]
      %v1669 = vld [vmem:[%s4 + $0x24] sm:$0xf]
      %v1670 = vld [vmem:[%s4 + $0x28] sm:$0xf]
      %v1671 = vld [vmem:[%s4 + $0x2c] sm:$0xf]
      %v1672 = vld [vmem:[%s4 + $0x30] sm:$0xf]
      %v1673 = vld [vmem:[%s4 + $0x34] sm:$0xf]
      %v1674 = vld [vmem:[%s4 + $0x38] sm:$0xf]
      %v1675 = vld [vmem:[%s4 + $0x3c] sm:$0xf]
      %v1676 = vld [vmem:[%s4 + $0x40] sm:$0xf]
      %v1677 = vld [vmem:[%s4 + $0x44] sm:$0xf]
      %v1678 = vld [vmem:[%s4 + $0x48] sm:$0xf]
      %v1679 = vld [vmem:[%s4 + $0x4c] sm:$0xf]
      %v1680 = vld [vmem:[%s4 + $0x50] sm:$0xf]
      %v1681 = vld [vmem:[%s4 + $0x54] sm:$0xf]
      %v1682 = vld [vmem:[%s4 + $0x58] sm:$0xf]
      %v1683 = vld [vmem:[%s4 + $0x5c] sm:$0xf]
      %v1684 = vld [vmem:[%s4 + $0x60] sm:$0xf]
      %v1685 = vld [vmem:[%s4 + $0x64] sm:$0xf]
      %v1686 = vld [vmem:[%s4 + $0x68] sm:$0xf]
      %v1687 = vld [vmem:[%s4 + $0x6c] sm:$0xf]
      %v1688 = vld [vmem:[%s4 + $0x70] sm:$0xf]
      %v1689 = vld [vmem:[%s4 + $0x74] sm:$0xf]
      %v1690 = vld [vmem:[%s4 + $0x78] sm:$0xf]
      %v1691 = vld [vmem:[%s4 + $0x7c] sm:$0xf]
      %v1724 = vunpack.c.l.b16 %v1660
      %v1725 = vunpack.c.l.b16 %v1661
      %v1726 = vunpack.c.l.b16 %v1662
      %v1727 = vunpack.c.l.b16 %v1663
      %v1728 = vunpack.c.l.b16 %v1664
      %v1729 = vunpack.c.l.b16 %v1665
      %v1730 = vunpack.c.l.b16 %v1666
      %v1731 = vunpack.c.l.b16 %v1667
      %v1732 = vunpack.c.l.b16 %v1668
      %v1733 = vunpack.c.l.b16 %v1669
      %v1734 = vunpack.c.l.b16 %v1670
      %v1735 = vunpack.c.l.b16 %v1671
      %v1736 = vunpack.c.l.b16 %v1672
      %v1737 = vunpack.c.l.b16 %v1673
      %v1738 = vunpack.c.l.b16 %v1674
      %v1739 = vunpack.c.l.b16 %v1675
      %v1740 = vunpack.c.l.b16 %v1676
      %v1741 = vunpack.c.l.b16 %v1677
      %v1742 = vunpack.c.l.b16 %v1678
      %v1743 = vunpack.c.l.b16 %v1679
      %v1744 = vunpack.c.l.b16 %v1680
      %v1745 = vunpack.c.l.b16 %v1681
      %v1746 = vunpack.c.l.b16 %v1682
      %v1747 = vunpack.c.l.b16 %v1683
      %v1748 = vunpack.c.l.b16 %v1684
      %v1749 = vunpack.c.l.b16 %v1685
      %v1750 = vunpack.c.l.b16 %v1686
      %v1751 = vunpack.c.l.b16 %v1687
      %v1752 = vunpack.c.l.b16 %v1688
      %v1753 = vunpack.c.l.b16 %v1689
      %v1754 = vunpack.c.l.b16 %v1690
      %v1755 = vunpack.c.l.b16 %v1691
      %v1756 = vpack.c.b16 %v1725, %v1724
      %v1757 = vpack.c.b16 %v1727, %v1726
      %v1758 = vpack.c.b16 %v1729, %v1728
      %v1759 = vpack.c.b16 %v1731, %v1730
      %v1760 = vpack.c.b16 %v1733, %v1732
      %v1761 = vpack.c.b16 %v1735, %v1734
      %v1762 = vpack.c.b16 %v1737, %v1736
      %v1763 = vpack.c.b16 %v1739, %v1738
      %v1764 = vpack.c.b16 %v1741, %v1740
      %v1765 = vpack.c.b16 %v1743, %v1742
      %v1766 = vpack.c.b16 %v1745, %v1744
      %v1767 = vpack.c.b16 %v1747, %v1746
      %v1768 = vpack.c.b16 %v1749, %v1748
      %v1769 = vpack.c.b16 %v1751, %v1750
      %v1770 = vpack.c.b16 %v1753, %v1752
      %v1771 = vpack.c.b16 %v1755, %v1754
      %1788 = vmatprep.subr.bf16.mxu0 0
      %1789 = vmatpush1.bf16.msra.mxu0 %v1756
      %1790 = vmatprep.subr.bf16.mxu0 0
      %1791 = vmatpush1.bf16.msra.mxu0 %v1757
      %1792 = vmatprep.subr.bf16.mxu0 0
      %1793 = vmatpush1.bf16.msra.mxu0 %v1758
      %1794 = vmatprep.subr.bf16.mxu0 0
      %1795 = vmatpush1.bf16.msra.mxu0 %v1759
      %1796 = vmatprep.subr.bf16.mxu0 0
      %1797 = vmatpush1.bf16.msra.mxu0 %v1760
      %1798 = vmatprep.subr.bf16.mxu0 0
      %1799 = vmatpush1.bf16.msra.mxu0 %v1761
      %1800 = vmatprep.subr.bf16.mxu0 0
      %1801 = vmatpush1.bf16.msra.mxu0 %v1762
      %1802 = vmatprep.subr.bf16.mxu0 0
      %1803 = vmatpush1.bf16.msra.mxu0 %v1763
      %1804 = vmatprep.subr.bf16.mxu0 0
      %1805 = vmatpush1.bf16.msra.mxu0 %v1764
      %1806 = vmatprep.subr.bf16.mxu0 0
      %1807 = vmatpush1.bf16.msra.mxu0 %v1765
      %1808 = vmatprep.subr.bf16.mxu0 0
      %1809 = vmatpush1.bf16.msra.mxu0 %v1766
      %1810 = vmatprep.subr.bf16.mxu0 0
      %1811 = vmatpush1.bf16.msra.mxu0 %v1767
      %1812 = vmatprep.subr.bf16.mxu0 0
      %1813 = vmatpush1.bf16.msra.mxu0 %v1768
      %1814 = vmatprep.subr.bf16.mxu0 0
      %1815 = vmatpush1.bf16.msra.mxu0 %v1769
      %1816 = vmatprep.subr.bf16.mxu0 0
      %1817 = vmatpush1.bf16.msra.mxu0 %v1770
      %1818 = vmatprep.subr.bf16.mxu0 0
      %1819 = vmatpush1.bf16.msra.mxu0 %v1771
      %1820 = vmatprep.mubr.bf16.mxu0 %v1659
      %1821 = vmatmul.mubr.bf16.gmra.mrb[0].mxu0 %v1658
      %v1822 = vpop.f32.mrb[0].mxu0
      %v1823 = vadd.f32 0.0, %v1822
      %v1824 = vpop.f32.mrb[0].mxu0
      %v1825 = vpop.f32.mrb[0].mxu0
      %v1826 = vpop.f32.mrb[0].mxu0
      %1827 = vdwg.mxu0
      %1828 = vst [vmem:[%s224] sm:$0xff] %v1823
      %p1829 = scmp.lt.s32.totalorder %s16, 1
      %s1830 = scalar_select %p1829, %s16, 1
      %s1831 = smul.addr %s1830, 8
      %s1832 = scalar_lea.vmem %s5, %s1831
      // Predicated region
      $region41: #{iraven_formula.1} parent=39 // pred_check
        %p1833 = pneg %p144
      $region42: #{iraven_formula.1} parent=39 // pred_check_branch
        %1835 = sbr.rel (%p1833) target = $region44
      $region43: #{iraven_formula.1} parent=39 // pred_region
        _
      $region44: #{iraven_formula.1} parent=39 // pred_fallthru
        _
    $region40: #{iraven_formula.1} parent=5 // pred_fallthru
      _
    %p1836 = scmp.le.s32.totalorder 2, %s11
    // Predicated region
    $region45: #{iraven_formula.1} parent=5 // pred_check
      %p1837 = pneg %p1836
    $region46: #{iraven_formula.1} parent=5 // pred_check_branch
      %1839 = sbr.rel (%p1837) target = $region48
    $region47: #{iraven_formula.1} parent=5 // pred_region
      %s1840 = ssub.s32 %s11, 2
      // Predicated region
      $region49: #{iraven_formula.1} parent=47 // pred_check
        %p1841 = pneg %p150
      $region50: #{iraven_formula.1} parent=47 // pred_check_branch
        %1843 = sbr.rel (%p1841) target = $region52
      $region51: #{iraven_formula.1} parent=47 // pred_region
        %p1844 = scmp.lt.s32.totalorder %s17, 1
        %s1845 = scalar_select %p1844, %s17, 1
        %s1846 = smul.addr %s1845, 8
        %s1847 = scalar_lea.vmem %s5, %s1846
      $region52: #{iraven_formula.1} parent=47 // pred_fallthru
        _
    $region48: #{iraven_formula.1} parent=5 // pred_fallthru
      _
  $region6: #{iraven_formula.1} parent=0 // loop_footer
    %s15 = sadd.s32 1, %s11
  $region7: #{iraven_formula.1} parent=0 // loop_footer_branch
    %10 = sbr.rel target = $region3
  $region8: #{iraven_formula.1} parent=0 // loop_exit
    _

</llo_original>
